<compile_context>
chip_gen: v7x
topology: tpu7x:2x2x1
jax: 0.10.0
libtpu: 0.0.40
codegen_flags: <defaults>
</compile_context>

<pallas_src>
import math

import jax
import jax.numpy as jnp
from jax.experimental import pallas as pl
from jax.experimental.pallas import tpu as pltpu

LANE = 128      # lane width: hidden channels / logit dim padded to this
SUBLANE = 8     # sublane granularity: batch dim padded to this


def _round_up(v, m):
    return (v + m - 1) // m * m


def _vmem():
    return pl.BlockSpec(memory_space=pltpu.MemorySpace.VMEM)


# ---------------------------------------------------------------------------
# Fused kernel:
#   for each layer l:
#     agg = A @ x + x                              (GIN sum aggregation, eps=0)
#     h   = ReLU(agg @ W1[l] + b1[l])
#     h   = ReLU(h   @ W2[l] + b2[l])
#     x   = h * bn_scale[l] + bn_shift[l]          (BatchNorm1d, eval)
#     xcat[:, l*Hp:(l+1)*Hp] = x                   (jk=True slab, lane-dense)
#   pooled = P @ xcat                              (global_mean_pool as matmul)
#   out    = ReLU(pooled @ LW1 + lb1) @ LW2 + lb2  (dropout = identity, eval)
# ---------------------------------------------------------------------------
def gin_fused_kernel(a_ref, x_ref, w1_ref, b1_ref, w2_ref, b2_ref,
                     scale_ref, shift_ref, p_ref, lw1_ref, lb1_ref,
                     lw2_ref, lb2_ref, o_ref, xcat_ref):
    num_layers = w1_ref.shape[0]
    hp = x_ref.shape[1]

    a = a_ref[...]                     # (Np, Np) bf16 -- edge counts, exact in bf16
    x = x_ref[...]                     # (Np, Hp) bf16

    # Static (unrolled) layer loop; A, x and all stacked weights stay in VMEM.
    for l in range(num_layers):
        agg = (jnp.dot(a, x, preferred_element_type=jnp.float32)
               + x.astype(jnp.float32))
        h = jnp.dot(agg.astype(jnp.bfloat16), w1_ref[l],
                    preferred_element_type=jnp.float32) + b1_ref[l]
        h = jnp.maximum(h, 0.0)
        h = jnp.dot(h.astype(jnp.bfloat16), w2_ref[l],
                    preferred_element_type=jnp.float32) + b2_ref[l]
        h = jnp.maximum(h, 0.0)
        h = h * scale_ref[l] + shift_ref[l]          # BN eval affine
        x = h.astype(jnp.bfloat16)
        xcat_ref[:, l * hp:(l + 1) * hp] = x         # 128-aligned slab write

    # global_mean_pool as matmul: P[b, i] = (batch[i] == b) / count_b
    pooled = jnp.dot(p_ref[...], xcat_ref[...], preferred_element_type=jnp.float32)
    h = jnp.dot(pooled.astype(jnp.bfloat16), lw1_ref[...],
                preferred_element_type=jnp.float32) + lb1_ref[...]
    h = jnp.maximum(h, 0.0)
    # dropout(p=0.5) skipped (training=False)
    o_ref[...] = jnp.dot(h.astype(jnp.bfloat16), lw2_ref[...],
                         preferred_element_type=jnp.float32) + lb2_ref[...]


# ---------------------------------------------------------------------------
# Wrapper: glue (embedding lookup, dense adjacency, pooling matrix, padding)
# in plain JAX; one fused pallas_call for the whole forward.
# ---------------------------------------------------------------------------
def gin_forward(params, z, edge_index, batch, num_graphs):
    hidden = params['z_emb'].shape[1]
    num_layers = len(params['convs'])
    n = z.shape[0]

    np_ = _round_up(max(n, LANE), LANE)               # padded node count
    hp = _round_up(hidden, LANE)                      # padded hidden width
    bp = _round_up(max(num_graphs, SUBLANE), SUBLANE) # padded batch
    op = LANE                                         # padded logit width

    # Embedding lookup (z is 1-D here; the 2-D sum branch is not exercised)
    x = jnp.take(params['z_emb'], z, axis=0).astype(jnp.float32)      # (N, H)

    # Dense adjacency with A[dst, src] = multiplicity (message flow src->dst)
    src, dst = edge_index[0], edge_index[1]
    a = jnp.zeros((n, n), jnp.float32).at[dst, src].add(1.0)

    # Mean-pool matrix
    onehot = (batch[None, :] == jnp.arange(num_graphs)[:, None]).astype(jnp.float32)
    counts = jnp.maximum(onehot.sum(axis=1, keepdims=True), 1.0)
    p = onehot / counts                                               # (B, N)

    # ---- pad to lane/sublane dense shapes, cast matmul operands to bf16 ----
    a_p = jnp.zeros((np_, np_), jnp.bfloat16).at[:n, :n].set(a.astype(jnp.bfloat16))
    x_p = jnp.zeros((np_, hp), jnp.bfloat16).at[:n, :hidden].set(x.astype(jnp.bfloat16))
    p_p = jnp.zeros((bp, np_), jnp.bfloat16).at[:num_graphs, :n].set(
        p.astype(jnp.bfloat16))

    def pad_w(w):  # (in, out) -> (hp, hp) bf16
        return jnp.zeros((hp, hp), jnp.bfloat16).at[:w.shape[0], :w.shape[1]].set(
            w.astype(jnp.bfloat16))

    def pad_v(v):  # (1, H) -> (1, hp) f32
        return jnp.zeros((1, hp), jnp.float32).at[:, :v.shape[1]].set(v)

    w1s = jnp.stack([pad_w(c[0]) for c in params['convs']])     # (L, hp, hp)
    b1s = jnp.stack([pad_v(c[1]) for c in params['convs']])     # (L, 1, hp)
    w2s = jnp.stack([pad_w(c[2]) for c in params['convs']])
    b2s = jnp.stack([pad_v(c[3]) for c in params['convs']])
    scales = jnp.stack([pad_v(c[4]) for c in params['convs']])
    shifts = jnp.stack([pad_v(c[5]) for c in params['convs']])

    # lin1: (L*H, H) -> (L*hp, hp), row blocks aligned with the padded jk slab
    lw1 = jnp.zeros((num_layers * hp, hp), jnp.bfloat16)
    for l in range(num_layers):
        blk = params['lin1_w'][l * hidden:(l + 1) * hidden, :]
        lw1 = lw1.at[l * hp:l * hp + hidden, :hidden].set(blk.astype(jnp.bfloat16))
    lb1 = jnp.zeros((1, hp), jnp.float32).at[:, :hidden].set(params['lin1_b'])

    # lin2: (H, 1) -> (hp, 128) so the final store is lane-dense
    lw2 = jnp.zeros((hp, op), jnp.bfloat16).at[:hidden, :1].set(
        params['lin2_w'].astype(jnp.bfloat16))
    lb2 = jnp.zeros((1, op), jnp.float32).at[:, :1].set(params['lin2_b'])

    out = pl.pallas_call(
        gin_fused_kernel,
        out_shape=jax.ShapeDtypeStruct((bp, op), jnp.float32),
        in_specs=[_vmem()] * 13,
        out_specs=_vmem(),
        scratch_shapes=[pltpu.VMEM((np_, num_layers * hp), jnp.bfloat16)],  # jk slab
    )(a_p, x_p, w1s, b1s, w2s, b2s, scales, shifts, p_p, lw1, lb1, lw2, lb2)

    return out[:num_graphs, :1]


# ---------------------------------------------------------------------------
# Pure-JAX f32 reference (same math, logical shapes) for a sanity check.
# ---------------------------------------------------------------------------
def gin_reference(params, z, edge_index, batch, num_graphs):
    x = jnp.take(params['z_emb'], z, axis=0).astype(jnp.float32)
    n = z.shape[0]
    src, dst = edge_index[0], edge_index[1]
    a = jnp.zeros((n, n), jnp.float32).at[dst, src].add(1.0)
    xs = []
    for (w1, b1, w2, b2, scale, shift) in params['convs']:
        agg = a @ x + x
        h = jnp.maximum(agg @ w1 + b1, 0.0)
        h = jnp.maximum(h @ w2 + b2, 0.0)
        x = h * scale + shift
        xs.append(x)
    xcat = jnp.concatenate(xs, axis=1)
    onehot = (batch[None, :] == jnp.arange(num_graphs)[:, None]).astype(jnp.float32)
    counts = jnp.maximum(onehot.sum(axis=1, keepdims=True), 1.0)
    pooled = (onehot / counts) @ xcat
    h = jnp.maximum(pooled @ params['lin1_w'] + params['lin1_b'], 0.0)
    return h @ params['lin2_w'] + params['lin2_b']


# ---------------------------------------------------------------------------
# Parameter construction (deterministic, synthetic)
# ---------------------------------------------------------------------------
def init_params(key, hidden, num_layers, max_z):
    ks = jax.random.split(key, 4 + 4 * num_layers)
    ki = iter(ks)

    def lin(k, fan_in, fan_out):
        w = 0.1 * jax.random.normal(k, (fan_in, fan_out), jnp.float32)
        b = jnp.zeros((1, fan_out), jnp.float32)
        return w, b

    params = {}
    params['z_emb'] = 0.1 * jax.random.normal(next(ki), (max_z, hidden), jnp.float32)

    bn_eps = 1e-5
    bn_scale = jnp.full((1, hidden), 1.0 / math.sqrt(1.0 + bn_eps), jnp.float32)
    bn_shift = jnp.zeros((1, hidden), jnp.float32)

    convs = []
    for _ in range(num_layers):
        w1, b1 = lin(next(ki), hidden, hidden)
        w2, b2 = lin(next(ki), hidden, hidden)
        convs.append((w1, b1, w2, b2, bn_scale, bn_shift))
    params['convs'] = convs

    params['lin1_w'], params['lin1_b'] = lin(next(ki), num_layers * hidden, hidden)
    params['lin2_w'], params['lin2_b'] = lin(next(ki), hidden, 1)
    return params


if __name__ == "__main__":
    hidden_channels = 32
    num_layers = 3
    max_z = 10
    num_nodes = 16
    num_graphs = 2

    key = jax.random.PRNGKey(0)
    k_param, k_z, k_e1, k_e2 = jax.random.split(key, 4)

    params = init_params(k_param, hidden_channels, num_layers, max_z)

    # Two graphs of 8 nodes each; 20 random intra-graph edges per graph.
    z = jax.random.randint(k_z, (num_nodes,), 0, max_z, dtype=jnp.int32)
    e0 = jax.random.randint(k_e1, (2, 20), 0, 8, dtype=jnp.int32)        # graph 0
    e1 = jax.random.randint(k_e2, (2, 20), 0, 8, dtype=jnp.int32) + 8    # graph 1
    edge_index = jnp.concatenate([e0, e1], axis=1)                       # (2, 40)
    batch = jnp.concatenate([jnp.zeros(8, jnp.int32), jnp.ones(8, jnp.int32)])

    out = gin_forward(params, z, edge_index, batch, num_graphs)
    out = jax.block_until_ready(out)
    assert out.shape == (num_graphs, 1) and out.dtype == jnp.float32

    ref = gin_reference(params, z, edge_index, batch, num_graphs)
    assert jnp.allclose(out, ref, rtol=5e-2, atol=3e-2), (out, ref)

    print("KERNEL_OK")
</pallas_src>

<mosaic_0001>
module attributes {stable_mosaic.version = 11 : i64} {
  func.func @gin_fused_kernel(%arg0: memref<128x128xbf16, #tpu.memory_space<vmem>>, %arg1: memref<128x128xbf16, #tpu.memory_space<vmem>>, %arg2: memref<3x128x128xbf16, #tpu.memory_space<vmem>>, %arg3: memref<3x1x128xf32, #tpu.memory_space<vmem>>, %arg4: memref<3x128x128xbf16, #tpu.memory_space<vmem>>, %arg5: memref<3x1x128xf32, #tpu.memory_space<vmem>>, %arg6: memref<3x1x128xf32, #tpu.memory_space<vmem>>, %arg7: memref<3x1x128xf32, #tpu.memory_space<vmem>>, %arg8: memref<8x128xbf16, #tpu.memory_space<vmem>>, %arg9: memref<384x128xbf16, #tpu.memory_space<vmem>>, %arg10: memref<1x128xf32, #tpu.memory_space<vmem>>, %arg11: memref<128x128xbf16, #tpu.memory_space<vmem>>, %arg12: memref<1x128xf32, #tpu.memory_space<vmem>>, %arg13: memref<8x128xf32, #tpu.memory_space<vmem>>, %arg14: memref<128x384xbf16, #tpu.memory_space<vmem>>) attributes {dimension_semantics = [], scalar_prefetch = 0 : i64, scratch_operands = 1 : i64, tpu.core_type = #tpu.core_type<tc>} {
    %c0 = arith.constant 0 : index
    %c0_0 = arith.constant 0 : index
    %0 = vector.load %arg0[%c0, %c0_0] : memref<128x128xbf16, #tpu.memory_space<vmem>>, vector<128x128xbf16>
    %c0_1 = arith.constant 0 : index
    %c0_2 = arith.constant 0 : index
    %1 = vector.load %arg1[%c0_1, %c0_2] : memref<128x128xbf16, #tpu.memory_space<vmem>>, vector<128x128xbf16>
    %cst = arith.constant dense<0.000000e+00> : vector<128x128xf32>
    %2 = tpu.matmul %0, %1, %cst {dimension_numbers = #tpu.dot_dimension_numbers<[1], [0], [0], [1], [0, 0, 1, 1], [], []>} : vector<128x128xbf16>, vector<128x128xbf16>, vector<128x128xf32> -> vector<128x128xf32>
    %3 = arith.extf %1 : vector<128x128xbf16> to vector<128x128xf32>
    %4 = arith.addf %2, %3 : vector<128x128xf32>
    %5 = arith.truncf %4 : vector<128x128xf32> to vector<128x128xbf16>
    %c0_3 = arith.constant 0 : index
    %c0_4 = arith.constant 0 : index
    %c0_5 = arith.constant 0 : index
    %6 = vector.load %arg2[%c0_3, %c0_4, %c0_5] : memref<3x128x128xbf16, #tpu.memory_space<vmem>>, vector<1x128x128xbf16>
    %7 = vector.shape_cast %6 : vector<1x128x128xbf16> to vector<128x128xbf16>
    %cst_6 = arith.constant dense<0.000000e+00> : vector<128x128xf32>
    %8 = tpu.matmul %5, %7, %cst_6 {dimension_numbers = #tpu.dot_dimension_numbers<[1], [0], [0], [1], [0, 0, 1, 1], [], []>} : vector<128x128xbf16>, vector<128x128xbf16>, vector<128x128xf32> -> vector<128x128xf32>
    %c0_7 = arith.constant 0 : index
    %c0_8 = arith.constant 0 : index
    %c0_9 = arith.constant 0 : index
    %9 = vector.load %arg3[%c0_7, %c0_8, %c0_9] : memref<3x1x128xf32, #tpu.memory_space<vmem>>, vector<1x1x128xf32>
    %10 = vector.shape_cast %9 : vector<1x1x128xf32> to vector<1x128xf32>
    %11 = vector.broadcast %10 : vector<1x128xf32> to vector<128x128xf32>
    %12 = arith.addf %8, %11 : vector<128x128xf32>
    %cst_10 = arith.constant 0.000000e+00 : f32
    %13 = vector.broadcast %cst_10 : f32 to vector<128x128xf32>
    %14 = arith.maximumf %12, %13 : vector<128x128xf32>
    %15 = arith.truncf %14 : vector<128x128xf32> to vector<128x128xbf16>
    %c0_11 = arith.constant 0 : index
    %c0_12 = arith.constant 0 : index
    %c0_13 = arith.constant 0 : index
    %16 = vector.load %arg4[%c0_11, %c0_12, %c0_13] : memref<3x128x128xbf16, #tpu.memory_space<vmem>>, vector<1x128x128xbf16>
    %17 = vector.shape_cast %16 : vector<1x128x128xbf16> to vector<128x128xbf16>
    %cst_14 = arith.constant dense<0.000000e+00> : vector<128x128xf32>
    %18 = tpu.matmul %15, %17, %cst_14 {dimension_numbers = #tpu.dot_dimension_numbers<[1], [0], [0], [1], [0, 0, 1, 1], [], []>} : vector<128x128xbf16>, vector<128x128xbf16>, vector<128x128xf32> -> vector<128x128xf32>
    %c0_15 = arith.constant 0 : index
    %c0_16 = arith.constant 0 : index
    %c0_17 = arith.constant 0 : index
    %19 = vector.load %arg5[%c0_15, %c0_16, %c0_17] : memref<3x1x128xf32, #tpu.memory_space<vmem>>, vector<1x1x128xf32>
    %20 = vector.shape_cast %19 : vector<1x1x128xf32> to vector<1x128xf32>
    %21 = vector.broadcast %20 : vector<1x128xf32> to vector<128x128xf32>
    %22 = arith.addf %18, %21 : vector<128x128xf32>
    %cst_18 = arith.constant 0.000000e+00 : f32
    %23 = vector.broadcast %cst_18 : f32 to vector<128x128xf32>
    %24 = arith.maximumf %22, %23 : vector<128x128xf32>
    %c0_19 = arith.constant 0 : index
    %c0_20 = arith.constant 0 : index
    %c0_21 = arith.constant 0 : index
    %25 = vector.load %arg6[%c0_19, %c0_20, %c0_21] : memref<3x1x128xf32, #tpu.memory_space<vmem>>, vector<1x1x128xf32>
    %26 = vector.shape_cast %25 : vector<1x1x128xf32> to vector<1x128xf32>
    %27 = vector.broadcast %26 : vector<1x128xf32> to vector<128x128xf32>
    %28 = arith.mulf %24, %27 : vector<128x128xf32>
    %c0_22 = arith.constant 0 : index
    %c0_23 = arith.constant 0 : index
    %c0_24 = arith.constant 0 : index
    %29 = vector.load %arg7[%c0_22, %c0_23, %c0_24] : memref<3x1x128xf32, #tpu.memory_space<vmem>>, vector<1x1x128xf32>
    %30 = vector.shape_cast %29 : vector<1x1x128xf32> to vector<1x128xf32>
    %31 = vector.broadcast %30 : vector<1x128xf32> to vector<128x128xf32>
    %32 = arith.addf %28, %31 : vector<128x128xf32>
    %33 = arith.truncf %32 : vector<128x128xf32> to vector<128x128xbf16>
    %c0_25 = arith.constant 0 : index
    %c0_26 = arith.constant 0 : index
    %34 = vector.load %arg14[%c0_25, %c0_26] : memref<128x384xbf16, #tpu.memory_space<vmem>>, vector<128x128xbf16>
    tpu.vector_store %arg14[%c0_25, %c0_26], %33 {strides = array<i32>} : memref<128x384xbf16, #tpu.memory_space<vmem>>, vector<128x128xbf16>,
    %cst_27 = arith.constant dense<0.000000e+00> : vector<128x128xf32>
    %35 = tpu.matmul %0, %33, %cst_27 {dimension_numbers = #tpu.dot_dimension_numbers<[1], [0], [0], [1], [0, 0, 1, 1], [], []>} : vector<128x128xbf16>, vector<128x128xbf16>, vector<128x128xf32> -> vector<128x128xf32>
    %36 = arith.extf %33 : vector<128x128xbf16> to vector<128x128xf32>
    %37 = arith.addf %35, %36 : vector<128x128xf32>
    %38 = arith.truncf %37 : vector<128x128xf32> to vector<128x128xbf16>
    %c1 = arith.constant 1 : index
    %c0_28 = arith.constant 0 : index
    %c0_29 = arith.constant 0 : index
    %39 = vector.load %arg2[%c1, %c0_28, %c0_29] : memref<3x128x128xbf16, #tpu.memory_space<vmem>>, vector<1x128x128xbf16>
    %40 = vector.shape_cast %39 : vector<1x128x128xbf16> to vector<128x128xbf16>
    %cst_30 = arith.constant dense<0.000000e+00> : vector<128x128xf32>
    %41 = tpu.matmul %38, %40, %cst_30 {dimension_numbers = #tpu.dot_dimension_numbers<[1], [0], [0], [1], [0, 0, 1, 1], [], []>} : vector<128x128xbf16>, vector<128x128xbf16>, vector<128x128xf32> -> vector<128x128xf32>
    %c1_31 = arith.constant 1 : index
    %c0_32 = arith.constant 0 : index
    %c0_33 = arith.constant 0 : index
    %42 = vector.load %arg3[%c1_31, %c0_32, %c0_33] : memref<3x1x128xf32, #tpu.memory_space<vmem>>, vector<1x1x128xf32>
    %43 = vector.shape_cast %42 : vector<1x1x128xf32> to vector<1x128xf32>
    %44 = vector.broadcast %43 : vector<1x128xf32> to vector<128x128xf32>
    %45 = arith.addf %41, %44 : vector<128x128xf32>
    %cst_34 = arith.constant 0.000000e+00 : f32
    %46 = vector.broadcast %cst_34 : f32 to vector<128x128xf32>
    %47 = arith.maximumf %45, %46 : vector<128x128xf32>
    %48 = arith.truncf %47 : vector<128x128xf32> to vector<128x128xbf16>
    %c1_35 = arith.constant 1 : index
    %c0_36 = arith.constant 0 : index
    %c0_37 = arith.constant 0 : index
    %49 = vector.load %arg4[%c1_35, %c0_36, %c0_37] : memref<3x128x128xbf16, #tpu.memory_space<vmem>>, vector<1x128x128xbf16>
    %50 = vector.shape_cast %49 : vector<1x128x128xbf16> to vector<128x128xbf16>
    %cst_38 = arith.constant dense<0.000000e+00> : vector<128x128xf32>
    %51 = tpu.matmul %48, %50, %cst_38 {dimension_numbers = #tpu.dot_dimension_numbers<[1], [0], [0], [1], [0, 0, 1, 1], [], []>} : vector<128x128xbf16>, vector<128x128xbf16>, vector<128x128xf32> -> vector<128x128xf32>
    %c1_39 = arith.constant 1 : index
    %c0_40 = arith.constant 0 : index
    %c0_41 = arith.constant 0 : index
    %52 = vector.load %arg5[%c1_39, %c0_40, %c0_41] : memref<3x1x128xf32, #tpu.memory_space<vmem>>, vector<1x1x128xf32>
    %53 = vector.shape_cast %52 : vector<1x1x128xf32> to vector<1x128xf32>
    %54 = vector.broadcast %53 : vector<1x128xf32> to vector<128x128xf32>
    %55 = arith.addf %51, %54 : vector<128x128xf32>
    %cst_42 = arith.constant 0.000000e+00 : f32
    %56 = vector.broadcast %cst_42 : f32 to vector<128x128xf32>
    %57 = arith.maximumf %55, %56 : vector<128x128xf32>
    %c1_43 = arith.constant 1 : index
    %c0_44 = arith.constant 0 : index
    %c0_45 = arith.constant 0 : index
    %58 = vector.load %arg6[%c1_43, %c0_44, %c0_45] : memref<3x1x128xf32, #tpu.memory_space<vmem>>, vector<1x1x128xf32>
    %59 = vector.shape_cast %58 : vector<1x1x128xf32> to vector<1x128xf32>
    %60 = vector.broadcast %59 : vector<1x128xf32> to vector<128x128xf32>
    %61 = arith.mulf %57, %60 : vector<128x128xf32>
    %c1_46 = arith.constant 1 : index
    %c0_47 = arith.constant 0 : index
    %c0_48 = arith.constant 0 : index
    %62 = vector.load %arg7[%c1_46, %c0_47, %c0_48] : memref<3x1x128xf32, #tpu.memory_space<vmem>>, vector<1x1x128xf32>
    %63 = vector.shape_cast %62 : vector<1x1x128xf32> to vector<1x128xf32>
    %64 = vector.broadcast %63 : vector<1x128xf32> to vector<128x128xf32>
    %65 = arith.addf %61, %64 : vector<128x128xf32>
    %66 = arith.truncf %65 : vector<128x128xf32> to vector<128x128xbf16>
    %c0_49 = arith.constant 0 : index
    %c128 = arith.constant 128 : index
    %67 = vector.load %arg14[%c0_49, %c128] : memref<128x384xbf16, #tpu.memory_space<vmem>>, vector<128x128xbf16>
    tpu.vector_store %arg14[%c0_49, %c128], %66 {strides = array<i32>} : memref<128x384xbf16, #tpu.memory_space<vmem>>, vector<128x128xbf16>,
    %cst_50 = arith.constant dense<0.000000e+00> : vector<128x128xf32>
    %68 = tpu.matmul %0, %66, %cst_50 {dimension_numbers = #tpu.dot_dimension_numbers<[1], [0], [0], [1], [0, 0, 1, 1], [], []>} : vector<128x128xbf16>, vector<128x128xbf16>, vector<128x128xf32> -> vector<128x128xf32>
    %69 = arith.extf %66 : vector<128x128xbf16> to vector<128x128xf32>
    %70 = arith.addf %68, %69 : vector<128x128xf32>
    %71 = arith.truncf %70 : vector<128x128xf32> to vector<128x128xbf16>
    %c2 = arith.constant 2 : index
    %c0_51 = arith.constant 0 : index
    %c0_52 = arith.constant 0 : index
    %72 = vector.load %arg2[%c2, %c0_51, %c0_52] : memref<3x128x128xbf16, #tpu.memory_space<vmem>>, vector<1x128x128xbf16>
    %73 = vector.shape_cast %72 : vector<1x128x128xbf16> to vector<128x128xbf16>
    %cst_53 = arith.constant dense<0.000000e+00> : vector<128x128xf32>
    %74 = tpu.matmul %71, %73, %cst_53 {dimension_numbers = #tpu.dot_dimension_numbers<[1], [0], [0], [1], [0, 0, 1, 1], [], []>} : vector<128x128xbf16>, vector<128x128xbf16>, vector<128x128xf32> -> vector<128x128xf32>
    %c2_54 = arith.constant 2 : index
    %c0_55 = arith.constant 0 : index
    %c0_56 = arith.constant 0 : index
    %75 = vector.load %arg3[%c2_54, %c0_55, %c0_56] : memref<3x1x128xf32, #tpu.memory_space<vmem>>, vector<1x1x128xf32>
    %76 = vector.shape_cast %75 : vector<1x1x128xf32> to vector<1x128xf32>
    %77 = vector.broadcast %76 : vector<1x128xf32> to vector<128x128xf32>
    %78 = arith.addf %74, %77 : vector<128x128xf32>
    %cst_57 = arith.constant 0.000000e+00 : f32
    %79 = vector.broadcast %cst_57 : f32 to vector<128x128xf32>
    %80 = arith.maximumf %78, %79 : vector<128x128xf32>
    %81 = arith.truncf %80 : vector<128x128xf32> to vector<128x128xbf16>
    %c2_58 = arith.constant 2 : index
    %c0_59 = arith.constant 0 : index
    %c0_60 = arith.constant 0 : index
    %82 = vector.load %arg4[%c2_58, %c0_59, %c0_60] : memref<3x128x128xbf16, #tpu.memory_space<vmem>>, vector<1x128x128xbf16>
    %83 = vector.shape_cast %82 : vector<1x128x128xbf16> to vector<128x128xbf16>
    %cst_61 = arith.constant dense<0.000000e+00> : vector<128x128xf32>
    %84 = tpu.matmul %81, %83, %cst_61 {dimension_numbers = #tpu.dot_dimension_numbers<[1], [0], [0], [1], [0, 0, 1, 1], [], []>} : vector<128x128xbf16>, vector<128x128xbf16>, vector<128x128xf32> -> vector<128x128xf32>
    %c2_62 = arith.constant 2 : index
    %c0_63 = arith.constant 0 : index
    %c0_64 = arith.constant 0 : index
    %85 = vector.load %arg5[%c2_62, %c0_63, %c0_64] : memref<3x1x128xf32, #tpu.memory_space<vmem>>, vector<1x1x128xf32>
    %86 = vector.shape_cast %85 : vector<1x1x128xf32> to vector<1x128xf32>
    %87 = vector.broadcast %86 : vector<1x128xf32> to vector<128x128xf32>
    %88 = arith.addf %84, %87 : vector<128x128xf32>
    %cst_65 = arith.constant 0.000000e+00 : f32
    %89 = vector.broadcast %cst_65 : f32 to vector<128x128xf32>
    %90 = arith.maximumf %88, %89 : vector<128x128xf32>
    %c2_66 = arith.constant 2 : index
    %c0_67 = arith.constant 0 : index
    %c0_68 = arith.constant 0 : index
    %91 = vector.load %arg6[%c2_66, %c0_67, %c0_68] : memref<3x1x128xf32, #tpu.memory_space<vmem>>, vector<1x1x128xf32>
    %92 = vector.shape_cast %91 : vector<1x1x128xf32> to vector<1x128xf32>
    %93 = vector.broadcast %92 : vector<1x128xf32> to vector<128x128xf32>
    %94 = arith.mulf %90, %93 : vector<128x128xf32>
    %c2_69 = arith.constant 2 : index
    %c0_70 = arith.constant 0 : index
    %c0_71 = arith.constant 0 : index
    %95 = vector.load %arg7[%c2_69, %c0_70, %c0_71] : memref<3x1x128xf32, #tpu.memory_space<vmem>>, vector<1x1x128xf32>
    %96 = vector.shape_cast %95 : vector<1x1x128xf32> to vector<1x128xf32>
    %97 = vector.broadcast %96 : vector<1x128xf32> to vector<128x128xf32>
    %98 = arith.addf %94, %97 : vector<128x128xf32>
    %99 = arith.truncf %98 : vector<128x128xf32> to vector<128x128xbf16>
    %c0_72 = arith.constant 0 : index
    %c256 = arith.constant 256 : index
    %100 = vector.load %arg14[%c0_72, %c256] : memref<128x384xbf16, #tpu.memory_space<vmem>>, vector<128x128xbf16>
    tpu.vector_store %arg14[%c0_72, %c256], %99 {strides = array<i32>} : memref<128x384xbf16, #tpu.memory_space<vmem>>, vector<128x128xbf16>,
    %c0_73 = arith.constant 0 : index
    %c0_74 = arith.constant 0 : index
    %101 = vector.load %arg8[%c0_73, %c0_74] : memref<8x128xbf16, #tpu.memory_space<vmem>>, vector<8x128xbf16>
    %c0_75 = arith.constant 0 : index
    %c0_76 = arith.constant 0 : index
    %102 = vector.load %arg14[%c0_75, %c0_76] : memref<128x384xbf16, #tpu.memory_space<vmem>>, vector<128x384xbf16>
    %cst_77 = arith.constant dense<0.000000e+00> : vector<8x384xf32>
    %103 = tpu.matmul %101, %102, %cst_77 {dimension_numbers = #tpu.dot_dimension_numbers<[1], [0], [0], [1], [0, 0, 1, 1], [], []>} : vector<8x128xbf16>, vector<128x384xbf16>, vector<8x384xf32> -> vector<8x384xf32>
    %104 = arith.truncf %103 : vector<8x384xf32> to vector<8x384xbf16>
    %c0_78 = arith.constant 0 : index
    %c0_79 = arith.constant 0 : index
    %105 = vector.load %arg9[%c0_78, %c0_79] : memref<384x128xbf16, #tpu.memory_space<vmem>>, vector<384x128xbf16>
    %cst_80 = arith.constant dense<0.000000e+00> : vector<8x128xf32>
    %106 = tpu.matmul %104, %105, %cst_80 {dimension_numbers = #tpu.dot_dimension_numbers<[1], [0], [0], [1], [0, 0, 1, 1], [], []>} : vector<8x384xbf16>, vector<384x128xbf16>, vector<8x128xf32> -> vector<8x128xf32>
    %c0_81 = arith.constant 0 : index
    %c0_82 = arith.constant 0 : index
    %107 = vector.load %arg10[%c0_81, %c0_82] : memref<1x128xf32, #tpu.memory_space<vmem>>, vector<1x128xf32>
    %108 = vector.broadcast %107 : vector<1x128xf32> to vector<8x128xf32>
    %109 = arith.addf %106, %108 : vector<8x128xf32>
    %cst_83 = arith.constant 0.000000e+00 : f32
    %110 = vector.broadcast %cst_83 : f32 to vector<8x128xf32>
    %111 = arith.maximumf %109, %110 : vector<8x128xf32>
    %112 = arith.truncf %111 : vector<8x128xf32> to vector<8x128xbf16>
    %c0_84 = arith.constant 0 : index
    %c0_85 = arith.constant 0 : index
    %113 = vector.load %arg11[%c0_84, %c0_85] : memref<128x128xbf16, #tpu.memory_space<vmem>>, vector<128x128xbf16>
    %cst_86 = arith.constant dense<0.000000e+00> : vector<8x128xf32>
    %114 = tpu.matmul %112, %113, %cst_86 {dimension_numbers = #tpu.dot_dimension_numbers<[1], [0], [0], [1], [0, 0, 1, 1], [], []>} : vector<8x128xbf16>, vector<128x128xbf16>, vector<8x128xf32> -> vector<8x128xf32>
    %c0_87 = arith.constant 0 : index
    %c0_88 = arith.constant 0 : index
    %115 = vector.load %arg12[%c0_87, %c0_88] : memref<1x128xf32, #tpu.memory_space<vmem>>, vector<1x128xf32>
    %116 = vector.broadcast %115 : vector<1x128xf32> to vector<8x128xf32>
    %117 = arith.addf %114, %116 : vector<8x128xf32>
    %c0_89 = arith.constant 0 : index
    %c0_90 = arith.constant 0 : index
    %118 = vector.load %arg13[%c0_89, %c0_90] : memref<8x128xf32, #tpu.memory_space<vmem>>, vector<8x128xf32>
    tpu.vector_store %arg13[%c0_89, %c0_90], %117 {strides = array<i32>} : memref<8x128xf32, #tpu.memory_space<vmem>>, vector<8x128xf32>,
    return
  }
}

</mosaic_0001>

<llo_original>
// kernel: tpu_custom_call.1
$region0: #{tpu_custom_call.1}
  #allocation0 [shape = 'u32[]', space=smem, size = 0x4, offset = 0x4, fixed_abs, tag = 'smem constant byte address 0x4 - core index']
  #allocation1 [shape = 'u32[144,128]{1,0:T(1,128)}', space=vmem, size = 0x12000, scoped, tag = 'internal scratch']
  #allocation2 [shape = 'bf16[128,384]{1,0:T(16,128)(2,1)}', space=vmem, size = 0x18000, scoped, tag = 'scratch operand']
  %s0 = inlined_call_operand.hbm [shape: bf16[128,128], index: 0, kind: input, shape index: {}]
  %s1 = inlined_call_operand.hbm [shape: bf16[128,128], index: 1, kind: input, shape index: {}]
  %s2 = inlined_call_operand.hbm [shape: bf16[3,128,128], index: 2, kind: input, shape index: {}]
  %s3 = inlined_call_operand.vmem [shape: f32[3,1,128], index: 3, kind: input, shape index: {}]
  %s4 = inlined_call_operand.hbm [shape: bf16[3,128,128], index: 4, kind: input, shape index: {}]
  %s5 = inlined_call_operand.vmem [shape: f32[3,1,128], index: 5, kind: input, shape index: {}]
  %s6 = inlined_call_operand.vmem [shape: f32[3,1,128], index: 6, kind: input, shape index: {}]
  %s7 = inlined_call_operand.vmem [shape: f32[3,1,128], index: 7, kind: input, shape index: {}]
  %s8 = inlined_call_operand.vmem [shape: bf16[8,128], index: 8, kind: input, shape index: {}]
  %s9 = inlined_call_operand.hbm [shape: bf16[384,128], index: 9, kind: input, shape index: {}]
  %s10 = inlined_call_operand.vmem [shape: f32[1,128], index: 10, kind: input, shape index: {}]
  %s11 = inlined_call_operand.hbm [shape: bf16[128,128], index: 11, kind: input, shape index: {}]
  %s12 = inlined_call_operand.vmem [shape: f32[1,128], index: 12, kind: input, shape index: {}]
  %s13 = inlined_call_operand.hbm [shape: f32[8,128], index: 13, kind: output, shape index: {}]
  %s14 = sld [smem:[#allocation0]]
  $region86: #{tpu_custom_call.1} parent=0
    _
  %s16 = ssub.s32 1, %s14
  %s17 = scalar_select 0, %s16, %s14
  $region1: #{tpu_custom_call.1} parent=0
    #allocation3 [shape = 'u8[32768]{0}', space=vmem, size = 0x8000, scoped, tag = 'input window, operand 0, single buffered']
    #allocation4 [shape = 's32[1]{0}', space=sflag, size = 0x4, scoped, tag = 'scoped memory for tpu_custom_call.1']
    #allocation5 [shape = 's32[1]{0}', space=sflag, size = 0x4, scoped, tag = 'scoped memory for tpu_custom_call.1']
    #allocation6 [shape = 'u8[32768]{0}', space=vmem, size = 0x8000, scoped, tag = 'input window, operand 1, single buffered']
    #allocation7 [shape = 's32[1]{0}', space=sflag, size = 0x4, scoped, tag = 'scoped memory for tpu_custom_call.1']
    #allocation8 [shape = 'u8[98304]{0}', space=vmem, size = 0x18000, scoped, tag = 'input window, operand 2, single buffered']
    #allocation9 [shape = 'u8[98304]{0}', space=vmem, size = 0x18000, scoped, tag = 'input window, operand 4, single buffered']
    #allocation10 [shape = 's32[1]{0}', space=sflag, size = 0x4, scoped, tag = 'scoped memory for tpu_custom_call.1']
    #allocation11 [shape = 'u8[98304]{0}', space=vmem, size = 0x18000, scoped, tag = 'input window, operand 9, single buffered']
    #allocation12 [shape = 'u8[32768]{0}', space=vmem, size = 0x8000, scoped, tag = 'input window, operand 11, single buffered']
    #allocation13 [shape = 's32[1]{0}', space=sflag, size = 0x4, scoped, tag = 'scoped memory for tpu_custom_call.1']
    #allocation14 [shape = 'u8[4096]{0}', space=vmem, size = 0x1000, scoped, tag = 'output window, operand 0, single buffered']
    %18 = vsyncpa [#allocation4], 0
    %19 = vsyncpa [#allocation7], 0
    %20 = vsyncpa [#allocation10], 0
    %21 = vsyncpa [#allocation13], 0
    %22 = vsyncpa [#allocation5], 0
    // Predicated region
    $region2: #{tpu_custom_call.1} parent=1 // pred_check
      _
    $region3: #{tpu_custom_call.1} parent=1 // pred_check_branch
      %24 = sbr.rel (0) target = $region5
    $region4: #{tpu_custom_call.1} parent=1 // pred_region
      %s26 = ssub.s32 1024, 1024
      %27 = vsyncadd [#allocation4], %s26
      %s28 = sshll.u32 [#allocation3], 4
      %s29 = int_to_ptr.vmem [resolvable:$true] %s28
      %34 = dma.hbm_to_vmem [thread:$0]  %s0, 1024, %s29, [#allocation4], 64, 64, 4
    $region5: #{tpu_custom_call.1} parent=1 // pred_fallthru
      _
    // Predicated region
    $region6: #{tpu_custom_call.1} parent=1 // pred_check
      _
    $region7: #{tpu_custom_call.1} parent=1 // pred_check_branch
      %36 = sbr.rel (0) target = $region9
    $region8: #{tpu_custom_call.1} parent=1 // pred_region
      %s38 = ssub.s32 1024, 1024
      %39 = vsyncadd [#allocation7], %s38
      %s40 = sshll.u32 [#allocation6], 4
      %s41 = int_to_ptr.vmem [resolvable:$true] %s40
      %46 = dma.hbm_to_vmem [thread:$0]  %s1, 1024, %s41, [#allocation7], 64, 64, 4
    $region9: #{tpu_custom_call.1} parent=1 // pred_fallthru
      _
    // Predicated region
    $region10: #{tpu_custom_call.1} parent=1 // pred_check
      _
    $region11: #{tpu_custom_call.1} parent=1 // pred_check_branch
      %48 = sbr.rel (0) target = $region13
    $region12: #{tpu_custom_call.1} parent=1 // pred_region
      %s50 = ssub.s32 3072, 3072
      %51 = vsyncadd [#allocation7], %s50
      %s52 = sshll.u32 [#allocation8], 4
      %s53 = int_to_ptr.vmem [resolvable:$true] %s52
      %58 = dma.hbm_to_vmem [thread:$0]  %s2, 3072, %s53, [#allocation7], 64, 64, 4
    $region13: #{tpu_custom_call.1} parent=1 // pred_fallthru
      _
    // Predicated region
    $region14: #{tpu_custom_call.1} parent=1 // pred_check
      _
    $region15: #{tpu_custom_call.1} parent=1 // pred_check_branch
      %60 = sbr.rel (0) target = $region17
    $region16: #{tpu_custom_call.1} parent=1 // pred_region
      _
    $region17: #{tpu_custom_call.1} parent=1 // pred_fallthru
      _
    // Predicated region
    $region18: #{tpu_custom_call.1} parent=1 // pred_check
      _
    $region19: #{tpu_custom_call.1} parent=1 // pred_check_branch
      %62 = sbr.rel (0) target = $region21
    $region20: #{tpu_custom_call.1} parent=1 // pred_region
      %s64 = ssub.s32 3072, 3072
      %65 = vsyncadd [#allocation10], %s64
      %s66 = sshll.u32 [#allocation9], 4
      %s67 = int_to_ptr.vmem [resolvable:$true] %s66
      %72 = dma.hbm_to_vmem [thread:$0]  %s4, 3072, %s67, [#allocation10], 64, 64, 4
    $region21: #{tpu_custom_call.1} parent=1 // pred_fallthru
      _
    // Predicated region
    $region22: #{tpu_custom_call.1} parent=1 // pred_check
      _
    $region23: #{tpu_custom_call.1} parent=1 // pred_check_branch
      %74 = sbr.rel (0) target = $region25
    $region24: #{tpu_custom_call.1} parent=1 // pred_region
      _
    $region25: #{tpu_custom_call.1} parent=1 // pred_fallthru
      _
    // Predicated region
    $region26: #{tpu_custom_call.1} parent=1 // pred_check
      _
    $region27: #{tpu_custom_call.1} parent=1 // pred_check_branch
      %76 = sbr.rel (0) target = $region29
    $region28: #{tpu_custom_call.1} parent=1 // pred_region
      _
    $region29: #{tpu_custom_call.1} parent=1 // pred_fallthru
      _
    // Predicated region
    $region30: #{tpu_custom_call.1} parent=1 // pred_check
      _
    $region31: #{tpu_custom_call.1} parent=1 // pred_check_branch
      %78 = sbr.rel (0) target = $region33
    $region32: #{tpu_custom_call.1} parent=1 // pred_region
      _
    $region33: #{tpu_custom_call.1} parent=1 // pred_fallthru
      _
    // Predicated region
    $region34: #{tpu_custom_call.1} parent=1 // pred_check
      _
    $region35: #{tpu_custom_call.1} parent=1 // pred_check_branch
      %80 = sbr.rel (0) target = $region37
    $region36: #{tpu_custom_call.1} parent=1 // pred_region
      _
    $region37: #{tpu_custom_call.1} parent=1 // pred_fallthru
      _
    // Predicated region
    $region38: #{tpu_custom_call.1} parent=1 // pred_check
      _
    $region39: #{tpu_custom_call.1} parent=1 // pred_check_branch
      %82 = sbr.rel (0) target = $region41
    $region40: #{tpu_custom_call.1} parent=1 // pred_region
      %s84 = ssub.s32 3072, 3072
      %85 = vsyncadd [#allocation10], %s84
      %s86 = sshll.u32 [#allocation11], 4
      %s87 = int_to_ptr.vmem [resolvable:$true] %s86
      %92 = dma.hbm_to_vmem [thread:$0]  %s9, 3072, %s87, [#allocation10], 64, 64, 4
    $region41: #{tpu_custom_call.1} parent=1 // pred_fallthru
      _
    // Predicated region
    $region42: #{tpu_custom_call.1} parent=1 // pred_check
      _
    $region43: #{tpu_custom_call.1} parent=1 // pred_check_branch
      %94 = sbr.rel (0) target = $region45
    $region44: #{tpu_custom_call.1} parent=1 // pred_region
      _
    $region45: #{tpu_custom_call.1} parent=1 // pred_fallthru
      _
    // Predicated region
    $region46: #{tpu_custom_call.1} parent=1 // pred_check
      _
    $region47: #{tpu_custom_call.1} parent=1 // pred_check_branch
      %96 = sbr.rel (0) target = $region49
    $region48: #{tpu_custom_call.1} parent=1 // pred_region
      %s98 = ssub.s32 1024, 1024
      %99 = vsyncadd [#allocation13], %s98
      %s100 = sshll.u32 [#allocation12], 4
      %s101 = int_to_ptr.vmem [resolvable:$true] %s100
      %106 = dma.hbm_to_vmem [thread:$0]  %s11, 1024, %s101, [#allocation13], 64, 64, 4
    $region49: #{tpu_custom_call.1} parent=1 // pred_fallthru
      _
    // Predicated region
    $region50: #{tpu_custom_call.1} parent=1 // pred_check
      _
    $region51: #{tpu_custom_call.1} parent=1 // pred_check_branch
      %108 = sbr.rel (0) target = $region53
    $region52: #{tpu_custom_call.1} parent=1 // pred_region
      _
    $region53: #{tpu_custom_call.1} parent=1 // pred_fallthru
      _
    // Predicated region
    $region54: #{tpu_custom_call.1} parent=1 // pred_check
      _
    $region55: #{tpu_custom_call.1} parent=1 // pred_check_branch
      %110 = sbr.rel (0) target = $region57
    $region56: #{tpu_custom_call.1} parent=1 // pred_region
      %111 = dma.done [#allocation4], 1024
    $region57: #{tpu_custom_call.1} parent=1 // pred_fallthru
      _
    // Predicated region
    $region58: #{tpu_custom_call.1} parent=1 // pred_check
      _
    $region59: #{tpu_custom_call.1} parent=1 // pred_check_branch
      %113 = sbr.rel (0) target = $region61
    $region60: #{tpu_custom_call.1} parent=1 // pred_region
      %114 = dma.done [#allocation7], 1024
    $region61: #{tpu_custom_call.1} parent=1 // pred_fallthru
      _
    // Predicated region
    $region62: #{tpu_custom_call.1} parent=1 // pred_check
      _
    $region63: #{tpu_custom_call.1} parent=1 // pred_check_branch
      %116 = sbr.rel (0) target = $region65
    $region64: #{tpu_custom_call.1} parent=1 // pred_region
      %117 = dma.done [#allocation7], 3072
    $region65: #{tpu_custom_call.1} parent=1 // pred_fallthru
      _
    // Predicated region
    $region66: #{tpu_custom_call.1} parent=1 // pred_check
      _
    $region67: #{tpu_custom_call.1} parent=1 // pred_check_branch
      %119 = sbr.rel (0) target = $region69
    $region68: #{tpu_custom_call.1} parent=1 // pred_region
      %120 = dma.done [#allocation10], 3072
    $region69: #{tpu_custom_call.1} parent=1 // pred_fallthru
      _
    // Predicated region
    $region70: #{tpu_custom_call.1} parent=1 // pred_check
      _
    $region71: #{tpu_custom_call.1} parent=1 // pred_check_branch
      %122 = sbr.rel (0) target = $region73
    $region72: #{tpu_custom_call.1} parent=1 // pred_region
      %123 = dma.done [#allocation10], 3072
    $region73: #{tpu_custom_call.1} parent=1 // pred_fallthru
      _
    // Predicated region
    $region74: #{tpu_custom_call.1} parent=1 // pred_check
      _
    $region75: #{tpu_custom_call.1} parent=1 // pred_check_branch
      %125 = sbr.rel (0) target = $region77
    $region76: #{tpu_custom_call.1} parent=1 // pred_region
      %126 = dma.done [#allocation13], 1024
    $region77: #{tpu_custom_call.1} parent=1 // pred_fallthru
      _
    %v128 = vld [vmem:[#allocation3] sm:$0xf]
    %v129 = vld [vmem:[#allocation3 + $0x4] sm:$0xf]
    %v130 = vld [vmem:[#allocation3 + $0x8] sm:$0xf]
    %v131 = vld [vmem:[#allocation3 + $0xc] sm:$0xf]
    %v132 = vld [vmem:[#allocation3 + $0x10] sm:$0xf]
    %v133 = vld [vmem:[#allocation3 + $0x14] sm:$0xf]
    %v134 = vld [vmem:[#allocation3 + $0x18] sm:$0xf]
    %v135 = vld [vmem:[#allocation3 + $0x1c] sm:$0xf]
    %v136 = vld [vmem:[#allocation3 + $0x20] sm:$0xf]
    %v137 = vld [vmem:[#allocation3 + $0x24] sm:$0xf]
    %v138 = vld [vmem:[#allocation3 + $0x28] sm:$0xf]
    %v139 = vld [vmem:[#allocation3 + $0x2c] sm:$0xf]
    %v140 = vld [vmem:[#allocation3 + $0x30] sm:$0xf]
    %v141 = vld [vmem:[#allocation3 + $0x34] sm:$0xf]
    %v142 = vld [vmem:[#allocation3 + $0x38] sm:$0xf]
    %v143 = vld [vmem:[#allocation3 + $0x3c] sm:$0xf]
    %v144 = vld [vmem:[#allocation6] sm:$0xf]
    %v145 = vld [vmem:[#allocation6 + $0x4] sm:$0xf]
    %v146 = vld [vmem:[#allocation6 + $0x8] sm:$0xf]
    %v147 = vld [vmem:[#allocation6 + $0xc] sm:$0xf]
    %v148 = vld [vmem:[#allocation6 + $0x10] sm:$0xf]
    %v149 = vld [vmem:[#allocation6 + $0x14] sm:$0xf]
    %v150 = vld [vmem:[#allocation6 + $0x18] sm:$0xf]
    %v151 = vld [vmem:[#allocation6 + $0x1c] sm:$0xf]
    %v152 = vld [vmem:[#allocation6 + $0x20] sm:$0xf]
    %v153 = vld [vmem:[#allocation6 + $0x24] sm:$0xf]
    %v154 = vld [vmem:[#allocation6 + $0x28] sm:$0xf]
    %v155 = vld [vmem:[#allocation6 + $0x2c] sm:$0xf]
    %v156 = vld [vmem:[#allocation6 + $0x30] sm:$0xf]
    %v157 = vld [vmem:[#allocation6 + $0x34] sm:$0xf]
    %v158 = vld [vmem:[#allocation6 + $0x38] sm:$0xf]
    %v159 = vld [vmem:[#allocation6 + $0x3c] sm:$0xf]
    %v160 = vunpack.c.l.bf16 %v144
    %v161 = vunpack.c.l.bf16 %v145
    %v162 = vunpack.c.l.bf16 %v146
    %v163 = vunpack.c.l.bf16 %v147
    %v164 = vunpack.c.l.bf16 %v148
    %v165 = vunpack.c.l.bf16 %v149
    %v166 = vunpack.c.l.bf16 %v150
    %v167 = vunpack.c.l.bf16 %v151
    %v168 = vunpack.c.l.bf16 %v152
    %v169 = vunpack.c.l.bf16 %v153
    %v170 = vunpack.c.l.bf16 %v154
    %v171 = vunpack.c.l.bf16 %v155
    %v172 = vunpack.c.l.bf16 %v156
    %v173 = vunpack.c.l.bf16 %v157
    %v174 = vunpack.c.l.bf16 %v158
    %v175 = vunpack.c.l.bf16 %v159
    %v192 = vunpack.c.l.b16 %v128
    %v193 = vunpack.c.l.b16 %v129
    %v194 = vunpack.c.l.b16 %v130
    %v195 = vunpack.c.l.b16 %v131
    %v196 = vunpack.c.l.b16 %v132
    %v197 = vunpack.c.l.b16 %v133
    %v198 = vunpack.c.l.b16 %v134
    %v199 = vunpack.c.l.b16 %v135
    %v200 = vunpack.c.l.b16 %v136
    %v201 = vunpack.c.l.b16 %v137
    %v202 = vunpack.c.l.b16 %v138
    %v203 = vunpack.c.l.b16 %v139
    %v204 = vunpack.c.l.b16 %v140
    %v205 = vunpack.c.l.b16 %v141
    %v206 = vunpack.c.l.b16 %v142
    %v207 = vunpack.c.l.b16 %v143
    %v208 = vpack.c.b16 %v193, %v192
    %v209 = vpack.c.b16 %v195, %v194
    %v210 = vpack.c.b16 %v197, %v196
    %v211 = vpack.c.b16 %v199, %v198
    %v212 = vpack.c.b16 %v201, %v200
    %v213 = vpack.c.b16 %v203, %v202
    %v214 = vpack.c.b16 %v205, %v204
    %v215 = vpack.c.b16 %v207, %v206
    %v240 = vunpack.c.l.b16 %v144
    %v241 = vunpack.c.l.b16 %v145
    %v242 = vunpack.c.l.b16 %v146
    %v243 = vunpack.c.l.b16 %v147
    %v244 = vunpack.c.l.b16 %v148
    %v245 = vunpack.c.l.b16 %v149
    %v246 = vunpack.c.l.b16 %v150
    %v247 = vunpack.c.l.b16 %v151
    %v248 = vunpack.c.l.b16 %v152
    %v249 = vunpack.c.l.b16 %v153
    %v250 = vunpack.c.l.b16 %v154
    %v251 = vunpack.c.l.b16 %v155
    %v252 = vunpack.c.l.b16 %v156
    %v253 = vunpack.c.l.b16 %v157
    %v254 = vunpack.c.l.b16 %v158
    %v255 = vunpack.c.l.b16 %v159
    %v256 = vpack.c.b16 %v241, %v240
    %v257 = vpack.c.b16 %v243, %v242
    %v258 = vpack.c.b16 %v245, %v244
    %v259 = vpack.c.b16 %v247, %v246
    %v260 = vpack.c.b16 %v249, %v248
    %v261 = vpack.c.b16 %v251, %v250
    %v262 = vpack.c.b16 %v253, %v252
    %v263 = vpack.c.b16 %v255, %v254
    %272 = vmatprep.subr.bf16.mxu0 0
    %273 = vmatpush1.bf16.msra.mxu0 %v256
    %274 = vmatprep.subr.bf16.mxu0 0
    %275 = vmatpush1.bf16.msra.mxu0 %v257
    %276 = vmatprep.subr.bf16.mxu0 0
    %277 = vmatpush1.bf16.msra.mxu0 %v258
    %278 = vmatprep.subr.bf16.mxu0 0
    %279 = vmatpush1.bf16.msra.mxu0 %v259
    %280 = vmatprep.subr.bf16.mxu0 0
    %281 = vmatpush1.bf16.msra.mxu0 %v260
    %282 = vmatprep.subr.bf16.mxu0 0
    %283 = vmatpush1.bf16.msra.mxu0 %v261
    %284 = vmatprep.subr.bf16.mxu0 0
    %285 = vmatpush1.bf16.msra.mxu0 %v262
    %286 = vmatprep.subr.bf16.mxu0 0
    %287 = vmatpush1.bf16.msra.mxu0 %v263
    %288 = vmatprep.subr.bf16.mxu0 0
    %289 = vmatpush1.bf16.msra.mxu0 0
    %290 = vmatprep.subr.bf16.mxu0 0
    %291 = vmatpush1.bf16.msra.mxu0 0
    %292 = vmatprep.subr.bf16.mxu0 0
    %293 = vmatpush1.bf16.msra.mxu0 0
    %294 = vmatprep.subr.bf16.mxu0 0
    %295 = vmatpush1.bf16.msra.mxu0 0
    %296 = vmatprep.subr.bf16.mxu0 0
    %297 = vmatpush1.bf16.msra.mxu0 0
    %298 = vmatprep.subr.bf16.mxu0 0
    %299 = vmatpush1.bf16.msra.mxu0 0
    %300 = vmatprep.subr.bf16.mxu0 0
    %301 = vmatpush1.bf16.msra.mxu0 0
    %302 = vmatprep.subr.bf16.mxu0 0
    %303 = vmatpush1.bf16.msra.mxu0 0
    %304 = vmatprep.mubr.bf16.mxu0 0
    %305 = vmatmul.mubr.bf16.gmra.mrb[0].mxu0 %v208
    %v306 = vpop.f32.mrb[0].mxu0
    %v307 = vadd.f32 %v160, %v306
    %v308 = vpop.f32.mrb[0].mxu0
    %v309 = vpop.f32.mrb[0].mxu0
    %v310 = vadd.f32 %v161, %v309
    %v311 = vpop.f32.mrb[0].mxu0
    %312 = vmatprep.mubr.bf16.mxu0 0
    %313 = vmatmul.mubr.bf16.gmra.mrb[0].mxu0 %v209
    %v314 = vpop.f32.mrb[0].mxu0
    %v315 = vadd.f32 %v162, %v314
    %v316 = vpop.f32.mrb[0].mxu0
    %v317 = vpop.f32.mrb[0].mxu0
    %v318 = vadd.f32 %v163, %v317
    %v319 = vpop.f32.mrb[0].mxu0
    %320 = vmatprep.mubr.bf16.mxu0 0
    %321 = vmatmul.mubr.bf16.gmra.mrb[0].mxu0 %v210
    %v322 = vpop.f32.mrb[0].mxu0
    %v323 = vadd.f32 %v164, %v322
    %v324 = vpop.f32.mrb[0].mxu0
    %v325 = vpop.f32.mrb[0].mxu0
    %v326 = vadd.f32 %v165, %v325
    %v327 = vpop.f32.mrb[0].mxu0
    %328 = vmatprep.mubr.bf16.mxu0 0
    %329 = vmatmul.mubr.bf16.gmra.mrb[0].mxu0 %v211
    %v330 = vpop.f32.mrb[0].mxu0
    %v331 = vadd.f32 %v166, %v330
    %v332 = vpop.f32.mrb[0].mxu0
    %v333 = vpop.f32.mrb[0].mxu0
    %v334 = vadd.f32 %v167, %v333
    %v335 = vpop.f32.mrb[0].mxu0
    %336 = vmatprep.mubr.bf16.mxu0 0
    %337 = vmatmul.mubr.bf16.gmra.mrb[0].mxu0 %v212
    %v338 = vpop.f32.mrb[0].mxu0
    %v339 = vadd.f32 %v168, %v338
    %v340 = vpop.f32.mrb[0].mxu0
    %v341 = vpop.f32.mrb[0].mxu0
    %v342 = vadd.f32 %v169, %v341
    %v343 = vpop.f32.mrb[0].mxu0
    %344 = vmatprep.mubr.bf16.mxu0 0
    %345 = vmatmul.mubr.bf16.gmra.mrb[0].mxu0 %v213
    %v346 = vpop.f32.mrb[0].mxu0
    %v347 = vadd.f32 %v170, %v346
    %v348 = vpop.f32.mrb[0].mxu0
    %v349 = vpop.f32.mrb[0].mxu0
    %v350 = vadd.f32 %v171, %v349
    %v351 = vpop.f32.mrb[0].mxu0
    %352 = vmatprep.mubr.bf16.mxu0 0
    %353 = vmatmul.mubr.bf16.gmra.mrb[0].mxu0 %v214
    %v354 = vpop.f32.mrb[0].mxu0
    %v355 = vadd.f32 %v172, %v354
    %v356 = vpop.f32.mrb[0].mxu0
    %v357 = vpop.f32.mrb[0].mxu0
    %v358 = vadd.f32 %v173, %v357
    %v359 = vpop.f32.mrb[0].mxu0
    %360 = vmatprep.mubr.bf16.mxu0 0
    %361 = vmatmul.mubr.bf16.gmra.mrb[0].mxu0 %v215
    %v362 = vpop.f32.mrb[0].mxu0
    %v363 = vadd.f32 %v174, %v362
    %v364 = vpop.f32.mrb[0].mxu0
    %v365 = vpop.f32.mrb[0].mxu0
    %v366 = vadd.f32 %v175, %v365
    %v367 = vpop.f32.mrb[0].mxu0
    %368 = vdwg.mxu0
    %v369 = vpack.c.bf16 %v310, %v307
    %v370 = vpack.c.bf16 %v318, %v315
    %v371 = vpack.c.bf16 %v326, %v323
    %v372 = vpack.c.bf16 %v334, %v331
    %v373 = vpack.c.bf16 %v342, %v339
    %v374 = vpack.c.bf16 %v350, %v347
    %v375 = vpack.c.bf16 %v358, %v355
    %v376 = vpack.c.bf16 %v366, %v363
    %v377 = vld [vmem:[#allocation8] sm:$0xf]
    %v378 = vld [vmem:[#allocation8 + $0x4] sm:$0xf]
    %v379 = vld [vmem:[#allocation8 + $0x8] sm:$0xf]
    %v380 = vld [vmem:[#allocation8 + $0xc] sm:$0xf]
    %v381 = vld [vmem:[#allocation8 + $0x10] sm:$0xf]
    %v382 = vld [vmem:[#allocation8 + $0x14] sm:$0xf]
    %v383 = vld [vmem:[#allocation8 + $0x18] sm:$0xf]
    %v384 = vld [vmem:[#allocation8 + $0x1c] sm:$0xf]
    %v385 = vld [vmem:[#allocation8 + $0x20] sm:$0xf]
    %v386 = vld [vmem:[#allocation8 + $0x24] sm:$0xf]
    %v387 = vld [vmem:[#allocation8 + $0x28] sm:$0xf]
    %v388 = vld [vmem:[#allocation8 + $0x2c] sm:$0xf]
    %v389 = vld [vmem:[#allocation8 + $0x30] sm:$0xf]
    %v390 = vld [vmem:[#allocation8 + $0x34] sm:$0xf]
    %v391 = vld [vmem:[#allocation8 + $0x38] sm:$0xf]
    %v392 = vld [vmem:[#allocation8 + $0x3c] sm:$0xf]
    %v393 = vld [vmem:[%s3] sm:$0x1]
    %v395 = vlaneseq
    %v396 = vshrl.u32 %v395, 7
    %v397 = vsub.s32 0, %v396
    %v398 = vrot.slane %v393, %v397
    %v416 = vunpack.c.l.b16 %v377
    %v417 = vunpack.c.l.b16 %v378
    %v418 = vunpack.c.l.b16 %v379
    %v419 = vunpack.c.l.b16 %v380
    %v420 = vunpack.c.l.b16 %v381
    %v421 = vunpack.c.l.b16 %v382
    %v422 = vunpack.c.l.b16 %v383
    %v423 = vunpack.c.l.b16 %v384
    %v424 = vunpack.c.l.b16 %v385
    %v425 = vunpack.c.l.b16 %v386
    %v426 = vunpack.c.l.b16 %v387
    %v427 = vunpack.c.l.b16 %v388
    %v428 = vunpack.c.l.b16 %v389
    %v429 = vunpack.c.l.b16 %v390
    %v430 = vunpack.c.l.b16 %v391
    %v431 = vunpack.c.l.b16 %v392
    %v432 = vpack.c.b16 %v417, %v416
    %v433 = vpack.c.b16 %v419, %v418
    %v434 = vpack.c.b16 %v421, %v420
    %v435 = vpack.c.b16 %v423, %v422
    %v436 = vpack.c.b16 %v425, %v424
    %v437 = vpack.c.b16 %v427, %v426
    %v438 = vpack.c.b16 %v429, %v428
    %v439 = vpack.c.b16 %v431, %v430
    %448 = vmatprep.subr.bf16.mxu0 0
    %449 = vmatpush1.bf16.msra.mxu0 %v432
    %450 = vmatprep.subr.bf16.mxu0 0
    %451 = vmatpush1.bf16.msra.mxu0 %v433
    %452 = vmatprep.subr.bf16.mxu0 0
    %453 = vmatpush1.bf16.msra.mxu0 %v434
    %454 = vmatprep.subr.bf16.mxu0 0
    %455 = vmatpush1.bf16.msra.mxu0 %v435
    %456 = vmatprep.subr.bf16.mxu0 0
    %457 = vmatpush1.bf16.msra.mxu0 %v436
    %458 = vmatprep.subr.bf16.mxu0 0
    %459 = vmatpush1.bf16.msra.mxu0 %v437
    %460 = vmatprep.subr.bf16.mxu0 0
    %461 = vmatpush1.bf16.msra.mxu0 %v438
    %462 = vmatprep.subr.bf16.mxu0 0
    %463 = vmatpush1.bf16.msra.mxu0 %v439
    %464 = vmatprep.subr.bf16.mxu0 0
    %465 = vmatpush1.bf16.msra.mxu0 0
    %466 = vmatprep.subr.bf16.mxu0 0
    %467 = vmatpush1.bf16.msra.mxu0 0
    %468 = vmatprep.subr.bf16.mxu0 0
    %469 = vmatpush1.bf16.msra.mxu0 0
    %470 = vmatprep.subr.bf16.mxu0 0
    %471 = vmatpush1.bf16.msra.mxu0 0
    %472 = vmatprep.subr.bf16.mxu0 0
    %473 = vmatpush1.bf16.msra.mxu0 0
    %474 = vmatprep.subr.bf16.mxu0 0
    %475 = vmatpush1.bf16.msra.mxu0 0
    %476 = vmatprep.subr.bf16.mxu0 0
    %477 = vmatpush1.bf16.msra.mxu0 0
    %478 = vmatprep.subr.bf16.mxu0 0
    %479 = vmatpush1.bf16.msra.mxu0 0
    %480 = vmatprep.mubr.bf16.mxu0 0
    %481 = vmatmul.mubr.bf16.gmra.mrb[0].mxu0 %v369
    %v482 = vpop.f32.mrb[0].mxu0
    %v483 = vadd.f32 %v398, %v482
    %v484 = vpop.f32.mrb[0].mxu0
    %v485 = vpop.f32.mrb[0].mxu0
    %v486 = vadd.f32 %v398, %v485
    %v487 = vpop.f32.mrb[0].mxu0
    %488 = vmatprep.mubr.bf16.mxu0 0
    %489 = vmatmul.mubr.bf16.gmra.mrb[0].mxu0 %v370
    %v490 = vpop.f32.mrb[0].mxu0
    %v491 = vadd.f32 %v398, %v490
    %v492 = vpop.f32.mrb[0].mxu0
    %v493 = vpop.f32.mrb[0].mxu0
    %v494 = vadd.f32 %v398, %v493
    %v495 = vpop.f32.mrb[0].mxu0
    %496 = vmatprep.mubr.bf16.mxu0 0
    %497 = vmatmul.mubr.bf16.gmra.mrb[0].mxu0 %v371
    %v498 = vpop.f32.mrb[0].mxu0
    %v499 = vadd.f32 %v398, %v498
    %v500 = vpop.f32.mrb[0].mxu0
    %v501 = vpop.f32.mrb[0].mxu0
    %v502 = vadd.f32 %v398, %v501
    %v503 = vpop.f32.mrb[0].mxu0
    %504 = vmatprep.mubr.bf16.mxu0 0
    %505 = vmatmul.mubr.bf16.gmra.mrb[0].mxu0 %v372
    %v506 = vpop.f32.mrb[0].mxu0
    %v507 = vadd.f32 %v398, %v506
    %v508 = vpop.f32.mrb[0].mxu0
    %v509 = vpop.f32.mrb[0].mxu0
    %v510 = vadd.f32 %v398, %v509
    %v511 = vpop.f32.mrb[0].mxu0
    %512 = vmatprep.mubr.bf16.mxu0 0
    %513 = vmatmul.mubr.bf16.gmra.mrb[0].mxu0 %v373
    %v514 = vpop.f32.mrb[0].mxu0
    %v515 = vadd.f32 %v398, %v514
    %v516 = vpop.f32.mrb[0].mxu0
    %v517 = vpop.f32.mrb[0].mxu0
    %v518 = vadd.f32 %v398, %v517
    %v519 = vpop.f32.mrb[0].mxu0
    %520 = vmatprep.mubr.bf16.mxu0 0
    %521 = vmatmul.mubr.bf16.gmra.mrb[0].mxu0 %v374
    %v522 = vpop.f32.mrb[0].mxu0
    %v523 = vadd.f32 %v398, %v522
    %v524 = vpop.f32.mrb[0].mxu0
    %v525 = vpop.f32.mrb[0].mxu0
    %v526 = vadd.f32 %v398, %v525
    %v527 = vpop.f32.mrb[0].mxu0
    %528 = vmatprep.mubr.bf16.mxu0 0
    %529 = vmatmul.mubr.bf16.gmra.mrb[0].mxu0 %v375
    %v530 = vpop.f32.mrb[0].mxu0
    %v531 = vadd.f32 %v398, %v530
    %v532 = vpop.f32.mrb[0].mxu0
    %v533 = vpop.f32.mrb[0].mxu0
    %v534 = vadd.f32 %v398, %v533
    %v535 = vpop.f32.mrb[0].mxu0
    %536 = vmatprep.mubr.bf16.mxu0 0
    %537 = vmatmul.mubr.bf16.gmra.mrb[0].mxu0 %v376
    %v538 = vpop.f32.mrb[0].mxu0
    %v539 = vadd.f32 %v398, %v538
    %v540 = vpop.f32.mrb[0].mxu0
    %v541 = vpop.f32.mrb[0].mxu0
    %v542 = vadd.f32 %v398, %v541
    %v543 = vpop.f32.mrb[0].mxu0
    %544 = vdwg.mxu0
    %v545 = vmax.f32 %v483, 0.0
    %v546 = vmax.f32 %v486, 0.0
    %v547 = vmax.f32 %v491, 0.0
    %v548 = vmax.f32 %v494, 0.0
    %v549 = vmax.f32 %v499, 0.0
    %v550 = vmax.f32 %v502, 0.0
    %v551 = vmax.f32 %v507, 0.0
    %v552 = vmax.f32 %v510, 0.0
    %v553 = vmax.f32 %v515, 0.0
    %v554 = vmax.f32 %v518, 0.0
    %v555 = vmax.f32 %v523, 0.0
    %v556 = vmax.f32 %v526, 0.0
    %v557 = vmax.f32 %v531, 0.0
    %v558 = vmax.f32 %v534, 0.0
    %v559 = vmax.f32 %v539, 0.0
    %v560 = vmax.f32 %v542, 0.0
    %v561 = vpack.c.bf16 %v546, %v545
    %v562 = vpack.c.bf16 %v548, %v547
    %v563 = vpack.c.bf16 %v550, %v549
    %v564 = vpack.c.bf16 %v552, %v551
    %v565 = vpack.c.bf16 %v554, %v553
    %v566 = vpack.c.bf16 %v556, %v555
    %v567 = vpack.c.bf16 %v558, %v557
    %v568 = vpack.c.bf16 %v560, %v559
    %v569 = vld [vmem:[#allocation9] sm:$0xf]
    %v570 = vld [vmem:[#allocation9 + $0x4] sm:$0xf]
    %v571 = vld [vmem:[#allocation9 + $0x8] sm:$0xf]
    %v572 = vld [vmem:[#allocation9 + $0xc] sm:$0xf]
    %v573 = vld [vmem:[#allocation9 + $0x10] sm:$0xf]
    %v574 = vld [vmem:[#allocation9 + $0x14] sm:$0xf]
    %v575 = vld [vmem:[#allocation9 + $0x18] sm:$0xf]
    %v576 = vld [vmem:[#allocation9 + $0x1c] sm:$0xf]
    %v577 = vld [vmem:[#allocation9 + $0x20] sm:$0xf]
    %v578 = vld [vmem:[#allocation9 + $0x24] sm:$0xf]
    %v579 = vld [vmem:[#allocation9 + $0x28] sm:$0xf]
    %v580 = vld [vmem:[#allocation9 + $0x2c] sm:$0xf]
    %v581 = vld [vmem:[#allocation9 + $0x30] sm:$0xf]
    %v582 = vld [vmem:[#allocation9 + $0x34] sm:$0xf]
    %v583 = vld [vmem:[#allocation9 + $0x38] sm:$0xf]
    %v584 = vld [vmem:[#allocation9 + $0x3c] sm:$0xf]
    %v585 = vld [vmem:[%s5] sm:$0x1]
    %v587 = vlaneseq
    %v588 = vshrl.u32 %v587, 7
    %v589 = vsub.s32 0, %v588
    %v590 = vrot.slane %v585, %v589
    %v608 = vunpack.c.l.b16 %v569
    %v609 = vunpack.c.l.b16 %v570
    %v610 = vunpack.c.l.b16 %v571
    %v611 = vunpack.c.l.b16 %v572
    %v612 = vunpack.c.l.b16 %v573
    %v613 = vunpack.c.l.b16 %v574
    %v614 = vunpack.c.l.b16 %v575
    %v615 = vunpack.c.l.b16 %v576
    %v616 = vunpack.c.l.b16 %v577
    %v617 = vunpack.c.l.b16 %v578
    %v618 = vunpack.c.l.b16 %v579
    %v619 = vunpack.c.l.b16 %v580
    %v620 = vunpack.c.l.b16 %v581
    %v621 = vunpack.c.l.b16 %v582
    %v622 = vunpack.c.l.b16 %v583
    %v623 = vunpack.c.l.b16 %v584
    %v624 = vpack.c.b16 %v609, %v608
    %v625 = vpack.c.b16 %v611, %v610
    %v626 = vpack.c.b16 %v613, %v612
    %v627 = vpack.c.b16 %v615, %v614
    %v628 = vpack.c.b16 %v617, %v616
    %v629 = vpack.c.b16 %v619, %v618
    %v630 = vpack.c.b16 %v621, %v620
    %v631 = vpack.c.b16 %v623, %v622
    %640 = vmatprep.subr.bf16.mxu0 0
    %641 = vmatpush1.bf16.msra.mxu0 %v624
    %642 = vmatprep.subr.bf16.mxu0 0
    %643 = vmatpush1.bf16.msra.mxu0 %v625
    %644 = vmatprep.subr.bf16.mxu0 0
    %645 = vmatpush1.bf16.msra.mxu0 %v626
    %646 = vmatprep.subr.bf16.mxu0 0
    %647 = vmatpush1.bf16.msra.mxu0 %v627
    %648 = vmatprep.subr.bf16.mxu0 0
    %649 = vmatpush1.bf16.msra.mxu0 %v628
    %650 = vmatprep.subr.bf16.mxu0 0
    %651 = vmatpush1.bf16.msra.mxu0 %v629
    %652 = vmatprep.subr.bf16.mxu0 0
    %653 = vmatpush1.bf16.msra.mxu0 %v630
    %654 = vmatprep.subr.bf16.mxu0 0
    %655 = vmatpush1.bf16.msra.mxu0 %v631
    %656 = vmatprep.subr.bf16.mxu0 0
    %657 = vmatpush1.bf16.msra.mxu0 0
    %658 = vmatprep.subr.bf16.mxu0 0
    %659 = vmatpush1.bf16.msra.mxu0 0
    %660 = vmatprep.subr.bf16.mxu0 0
    %661 = vmatpush1.bf16.msra.mxu0 0
    %662 = vmatprep.subr.bf16.mxu0 0
    %663 = vmatpush1.bf16.msra.mxu0 0
    %664 = vmatprep.subr.bf16.mxu0 0
    %665 = vmatpush1.bf16.msra.mxu0 0
    %666 = vmatprep.subr.bf16.mxu0 0
    %667 = vmatpush1.bf16.msra.mxu0 0
    %668 = vmatprep.subr.bf16.mxu0 0
    %669 = vmatpush1.bf16.msra.mxu0 0
    %670 = vmatprep.subr.bf16.mxu0 0
    %671 = vmatpush1.bf16.msra.mxu0 0
    %672 = vmatprep.mubr.bf16.mxu0 0
    %673 = vmatmul.mubr.bf16.gmra.mrb[0].mxu0 %v561
    %v674 = vpop.f32.mrb[0].mxu0
    %v675 = vadd.f32 %v590, %v674
    %v676 = vpop.f32.mrb[0].mxu0
    %v677 = vpop.f32.mrb[0].mxu0
    %v678 = vadd.f32 %v590, %v677
    %v679 = vpop.f32.mrb[0].mxu0
    %680 = vmatprep.mubr.bf16.mxu0 0
    %681 = vmatmul.mubr.bf16.gmra.mrb[0].mxu0 %v562
    %v682 = vpop.f32.mrb[0].mxu0
    %v683 = vadd.f32 %v590, %v682
    %v684 = vpop.f32.mrb[0].mxu0
    %v685 = vpop.f32.mrb[0].mxu0
    %v686 = vadd.f32 %v590, %v685
    %v687 = vpop.f32.mrb[0].mxu0
    %688 = vmatprep.mubr.bf16.mxu0 0
    %689 = vmatmul.mubr.bf16.gmra.mrb[0].mxu0 %v563
    %v690 = vpop.f32.mrb[0].mxu0
    %v691 = vadd.f32 %v590, %v690
    %v692 = vpop.f32.mrb[0].mxu0
    %v693 = vpop.f32.mrb[0].mxu0
    %v694 = vadd.f32 %v590, %v693
    %v695 = vpop.f32.mrb[0].mxu0
    %696 = vmatprep.mubr.bf16.mxu0 0
    %697 = vmatmul.mubr.bf16.gmra.mrb[0].mxu0 %v564
    %v698 = vpop.f32.mrb[0].mxu0
    %v699 = vadd.f32 %v590, %v698
    %v700 = vpop.f32.mrb[0].mxu0
    %v701 = vpop.f32.mrb[0].mxu0
    %v702 = vadd.f32 %v590, %v701
    %v703 = vpop.f32.mrb[0].mxu0
    %704 = vmatprep.mubr.bf16.mxu0 0
    %705 = vmatmul.mubr.bf16.gmra.mrb[0].mxu0 %v565
    %v706 = vpop.f32.mrb[0].mxu0
    %v707 = vadd.f32 %v590, %v706
    %v708 = vpop.f32.mrb[0].mxu0
    %v709 = vpop.f32.mrb[0].mxu0
    %v710 = vadd.f32 %v590, %v709
    %v711 = vpop.f32.mrb[0].mxu0
    %712 = vmatprep.mubr.bf16.mxu0 0
    %713 = vmatmul.mubr.bf16.gmra.mrb[0].mxu0 %v566
    %v714 = vpop.f32.mrb[0].mxu0
    %v715 = vadd.f32 %v590, %v714
    %v716 = vpop.f32.mrb[0].mxu0
    %v717 = vpop.f32.mrb[0].mxu0
    %v718 = vadd.f32 %v590, %v717
    %v719 = vpop.f32.mrb[0].mxu0
    %720 = vmatprep.mubr.bf16.mxu0 0
    %721 = vmatmul.mubr.bf16.gmra.mrb[0].mxu0 %v567
    %v722 = vpop.f32.mrb[0].mxu0
    %v723 = vadd.f32 %v590, %v722
    %v724 = vpop.f32.mrb[0].mxu0
    %v725 = vpop.f32.mrb[0].mxu0
    %v726 = vadd.f32 %v590, %v725
    %v727 = vpop.f32.mrb[0].mxu0
    %728 = vmatprep.mubr.bf16.mxu0 0
    %729 = vmatmul.mubr.bf16.gmra.mrb[0].mxu0 %v568
    %v730 = vpop.f32.mrb[0].mxu0
    %v731 = vadd.f32 %v590, %v730
    %v732 = vpop.f32.mrb[0].mxu0
    %v733 = vpop.f32.mrb[0].mxu0
    %v734 = vadd.f32 %v590, %v733
    %v735 = vpop.f32.mrb[0].mxu0
    %736 = vdwg.mxu0
    %v737 = vmax.f32 %v675, 0.0
    %v738 = vmax.f32 %v678, 0.0
    %v739 = vmax.f32 %v683, 0.0
    %v740 = vmax.f32 %v686, 0.0
    %v741 = vmax.f32 %v691, 0.0
    %v742 = vmax.f32 %v694, 0.0
    %v743 = vmax.f32 %v699, 0.0
    %v744 = vmax.f32 %v702, 0.0
    %v745 = vmax.f32 %v707, 0.0
    %v746 = vmax.f32 %v710, 0.0
    %v747 = vmax.f32 %v715, 0.0
    %v748 = vmax.f32 %v718, 0.0
    %v749 = vmax.f32 %v723, 0.0
    %v750 = vmax.f32 %v726, 0.0
    %v751 = vmax.f32 %v731, 0.0
    %v752 = vmax.f32 %v734, 0.0
    %v753 = vld [vmem:[%s6] sm:$0x1]
    %v755 = vlaneseq
    %v756 = vshrl.u32 %v755, 7
    %v757 = vsub.s32 0, %v756
    %v758 = vrot.slane %v753, %v757
    %v760 = vmul.f32 %v737, %v758
    %v761 = vmul.f32 %v738, %v758
    %v762 = vmul.f32 %v739, %v758
    %v763 = vmul.f32 %v740, %v758
    %v764 = vmul.f32 %v741, %v758
    %v765 = vmul.f32 %v742, %v758
    %v766 = vmul.f32 %v743, %v758
    %v767 = vmul.f32 %v744, %v758
    %v768 = vmul.f32 %v745, %v758
    %v769 = vmul.f32 %v746, %v758
    %v770 = vmul.f32 %v747, %v758
    %v771 = vmul.f32 %v748, %v758
    %v772 = vmul.f32 %v749, %v758
    %v773 = vmul.f32 %v750, %v758
    %v774 = vmul.f32 %v751, %v758
    %v775 = vmul.f32 %v752, %v758
    %v776 = vld [vmem:[%s7] sm:$0x1]
    %v778 = vlaneseq
    %v779 = vshrl.u32 %v778, 7
    %v780 = vsub.s32 0, %v779
    %v781 = vrot.slane %v776, %v780
    %v783 = vadd.f32 %v760, %v781
    %v784 = vadd.f32 %v761, %v781
    %v785 = vadd.f32 %v762, %v781
    %v786 = vadd.f32 %v763, %v781
    %v787 = vadd.f32 %v764, %v781
    %v788 = vadd.f32 %v765, %v781
    %v789 = vadd.f32 %v766, %v781
    %v790 = vadd.f32 %v767, %v781
    %v791 = vadd.f32 %v768, %v781
    %v792 = vadd.f32 %v769, %v781
    %v793 = vadd.f32 %v770, %v781
    %v794 = vadd.f32 %v771, %v781
    %v795 = vadd.f32 %v772, %v781
    %v796 = vadd.f32 %v773, %v781
    %v797 = vadd.f32 %v774, %v781
    %v798 = vadd.f32 %v775, %v781
    %v799 = vpack.c.bf16 %v784, %v783
    %v800 = vpack.c.bf16 %v786, %v785
    %v801 = vpack.c.bf16 %v788, %v787
    %v802 = vpack.c.bf16 %v790, %v789
    %v803 = vpack.c.bf16 %v792, %v791
    %v804 = vpack.c.bf16 %v794, %v793
    %v805 = vpack.c.bf16 %v796, %v795
    %v806 = vpack.c.bf16 %v798, %v797
    %807 = vst [vmem:[#allocation2] sm:$0xff] %v799
    %808 = vst [vmem:[#allocation2 + $0x18] sm:$0xff] %v800
    %809 = vst [vmem:[#allocation2 + $0x30] sm:$0xff] %v801
    %810 = vst [vmem:[#allocation2 + $0x48] sm:$0xff] %v802
    %811 = vst [vmem:[#allocation2 + $0x60] sm:$0xff] %v803
    %812 = vst [vmem:[#allocation2 + $0x78] sm:$0xff] %v804
    %813 = vst [vmem:[#allocation2 + $0x90] sm:$0xff] %v805
    %814 = vst [vmem:[#allocation2 + $0xa8] sm:$0xff] %v806
    %v815 = vunpack.c.l.bf16 %v799
    %v816 = vunpack.c.h.bf16 %v799
    %v817 = vunpack.c.l.bf16 %v800
    %v818 = vunpack.c.h.bf16 %v800
    %v819 = vunpack.c.l.bf16 %v801
    %v820 = vunpack.c.h.bf16 %v801
    %v821 = vunpack.c.l.bf16 %v802
    %v822 = vunpack.c.h.bf16 %v802
    %v823 = vunpack.c.l.bf16 %v803
    %v824 = vunpack.c.h.bf16 %v803
    %v825 = vunpack.c.l.bf16 %v804
    %v826 = vunpack.c.h.bf16 %v804
    %v827 = vunpack.c.l.bf16 %v805
    %v828 = vunpack.c.h.bf16 %v805
    %v829 = vunpack.c.l.bf16 %v806
    %v830 = vunpack.c.h.bf16 %v806
    %831 = vmatprep.subr.bf16.mxu0 0
    %832 = vmatpush1.bf16.msra.mxu0 %v799
    %833 = vmatprep.subr.bf16.mxu0 0
    %834 = vmatpush1.bf16.msra.mxu0 %v800
    %835 = vmatprep.subr.bf16.mxu0 0
    %836 = vmatpush1.bf16.msra.mxu0 %v801
    %837 = vmatprep.subr.bf16.mxu0 0
    %838 = vmatpush1.bf16.msra.mxu0 %v802
    %839 = vmatprep.subr.bf16.mxu0 0
    %840 = vmatpush1.bf16.msra.mxu0 %v803
    %841 = vmatprep.subr.bf16.mxu0 0
    %842 = vmatpush1.bf16.msra.mxu0 %v804
    %843 = vmatprep.subr.bf16.mxu0 0
    %844 = vmatpush1.bf16.msra.mxu0 %v805
    %845 = vmatprep.subr.bf16.mxu0 0
    %846 = vmatpush1.bf16.msra.mxu0 %v806
    %847 = vmatprep.subr.bf16.mxu0 0
    %848 = vmatpush1.bf16.msra.mxu0 0
    %849 = vmatprep.subr.bf16.mxu0 0
    %850 = vmatpush1.bf16.msra.mxu0 0
    %851 = vmatprep.subr.bf16.mxu0 0
    %852 = vmatpush1.bf16.msra.mxu0 0
    %853 = vmatprep.subr.bf16.mxu0 0
    %854 = vmatpush1.bf16.msra.mxu0 0
    %855 = vmatprep.subr.bf16.mxu0 0
    %856 = vmatpush1.bf16.msra.mxu0 0
    %857 = vmatprep.subr.bf16.mxu0 0
    %858 = vmatpush1.bf16.msra.mxu0 0
    %859 = vmatprep.subr.bf16.mxu0 0
    %860 = vmatpush1.bf16.msra.mxu0 0
    %861 = vmatprep.subr.bf16.mxu0 0
    %862 = vmatpush1.bf16.msra.mxu0 0
    %863 = vmatprep.mubr.bf16.mxu0 0
    %864 = vmatmul.mubr.bf16.gmra.mrb[0].mxu0 %v208
    %v865 = vpop.f32.mrb[0].mxu0
    %v866 = vadd.f32 %v815, %v865
    %v867 = vpop.f32.mrb[0].mxu0
    %v868 = vpop.f32.mrb[0].mxu0
    %v869 = vadd.f32 %v816, %v868
    %v870 = vpop.f32.mrb[0].mxu0
    %871 = vmatprep.mubr.bf16.mxu0 0
    %872 = vmatmul.mubr.bf16.gmra.mrb[0].mxu0 %v209
    %v873 = vpop.f32.mrb[0].mxu0
    %v874 = vadd.f32 %v817, %v873
    %v875 = vpop.f32.mrb[0].mxu0
    %v876 = vpop.f32.mrb[0].mxu0
    %v877 = vadd.f32 %v818, %v876
    %v878 = vpop.f32.mrb[0].mxu0
    %879 = vmatprep.mubr.bf16.mxu0 0
    %880 = vmatmul.mubr.bf16.gmra.mrb[0].mxu0 %v210
    %v881 = vpop.f32.mrb[0].mxu0
    %v882 = vadd.f32 %v819, %v881
    %v883 = vpop.f32.mrb[0].mxu0
    %v884 = vpop.f32.mrb[0].mxu0
    %v885 = vadd.f32 %v820, %v884
    %v886 = vpop.f32.mrb[0].mxu0
    %887 = vmatprep.mubr.bf16.mxu0 0
    %888 = vmatmul.mubr.bf16.gmra.mrb[0].mxu0 %v211
    %v889 = vpop.f32.mrb[0].mxu0
    %v890 = vadd.f32 %v821, %v889
    %v891 = vpop.f32.mrb[0].mxu0
    %v892 = vpop.f32.mrb[0].mxu0
    %v893 = vadd.f32 %v822, %v892
    %v894 = vpop.f32.mrb[0].mxu0
    %895 = vmatprep.mubr.bf16.mxu0 0
    %896 = vmatmul.mubr.bf16.gmra.mrb[0].mxu0 %v212
    %v897 = vpop.f32.mrb[0].mxu0
    %v898 = vadd.f32 %v823, %v897
    %v899 = vpop.f32.mrb[0].mxu0
    %v900 = vpop.f32.mrb[0].mxu0
    %v901 = vadd.f32 %v824, %v900
    %v902 = vpop.f32.mrb[0].mxu0
    %903 = vmatprep.mubr.bf16.mxu0 0
    %904 = vmatmul.mubr.bf16.gmra.mrb[0].mxu0 %v213
    %v905 = vpop.f32.mrb[0].mxu0
    %v906 = vadd.f32 %v825, %v905
    %v907 = vpop.f32.mrb[0].mxu0
    %v908 = vpop.f32.mrb[0].mxu0
    %v909 = vadd.f32 %v826, %v908
    %v910 = vpop.f32.mrb[0].mxu0
    %911 = vmatprep.mubr.bf16.mxu0 0
    %912 = vmatmul.mubr.bf16.gmra.mrb[0].mxu0 %v214
    %v913 = vpop.f32.mrb[0].mxu0
    %v914 = vadd.f32 %v827, %v913
    %v915 = vpop.f32.mrb[0].mxu0
    %v916 = vpop.f32.mrb[0].mxu0
    %v917 = vadd.f32 %v828, %v916
    %v918 = vpop.f32.mrb[0].mxu0
    %919 = vmatprep.mubr.bf16.mxu0 0
    %920 = vmatmul.mubr.bf16.gmra.mrb[0].mxu0 %v215
    %v921 = vpop.f32.mrb[0].mxu0
    %v922 = vadd.f32 %v829, %v921
    %v923 = vpop.f32.mrb[0].mxu0
    %v924 = vpop.f32.mrb[0].mxu0
    %v925 = vadd.f32 %v830, %v924
    %v926 = vpop.f32.mrb[0].mxu0
    %927 = vdwg.mxu0
    %v928 = vpack.c.bf16 %v869, %v866
    %v929 = vpack.c.bf16 %v877, %v874
    %v930 = vpack.c.bf16 %v885, %v882
    %v931 = vpack.c.bf16 %v893, %v890
    %v932 = vpack.c.bf16 %v901, %v898
    %v933 = vpack.c.bf16 %v909, %v906
    %v934 = vpack.c.bf16 %v917, %v914
    %v935 = vpack.c.bf16 %v925, %v922
    %s936 = scalar_lea.vmem [#allocation8], 64
    %v937 = vld [vmem:[%s936] sm:$0xf]
    %v938 = vld [vmem:[%s936 + $0x4] sm:$0xf]
    %v939 = vld [vmem:[%s936 + $0x8] sm:$0xf]
    %v940 = vld [vmem:[%s936 + $0xc] sm:$0xf]
    %v941 = vld [vmem:[%s936 + $0x10] sm:$0xf]
    %v942 = vld [vmem:[%s936 + $0x14] sm:$0xf]
    %v943 = vld [vmem:[%s936 + $0x18] sm:$0xf]
    %v944 = vld [vmem:[%s936 + $0x1c] sm:$0xf]
    %v945 = vld [vmem:[%s936 + $0x20] sm:$0xf]
    %v946 = vld [vmem:[%s936 + $0x24] sm:$0xf]
    %v947 = vld [vmem:[%s936 + $0x28] sm:$0xf]
    %v948 = vld [vmem:[%s936 + $0x2c] sm:$0xf]
    %v949 = vld [vmem:[%s936 + $0x30] sm:$0xf]
    %v950 = vld [vmem:[%s936 + $0x34] sm:$0xf]
    %v951 = vld [vmem:[%s936 + $0x38] sm:$0xf]
    %v952 = vld [vmem:[%s936 + $0x3c] sm:$0xf]
    %s953 = scalar_lea.vmem %s3, 1
    %v954 = vld [vmem:[%s953] sm:$0x1]
    %v956 = vlaneseq
    %v957 = vshrl.u32 %v956, 7
    %v958 = vsub.s32 0, %v957
    %v959 = vrot.slane %v954, %v958
    %v977 = vunpack.c.l.b16 %v937
    %v978 = vunpack.c.l.b16 %v938
    %v979 = vunpack.c.l.b16 %v939
    %v980 = vunpack.c.l.b16 %v940
    %v981 = vunpack.c.l.b16 %v941
    %v982 = vunpack.c.l.b16 %v942
    %v983 = vunpack.c.l.b16 %v943
    %v984 = vunpack.c.l.b16 %v944
    %v985 = vunpack.c.l.b16 %v945
    %v986 = vunpack.c.l.b16 %v946
    %v987 = vunpack.c.l.b16 %v947
    %v988 = vunpack.c.l.b16 %v948
    %v989 = vunpack.c.l.b16 %v949
    %v990 = vunpack.c.l.b16 %v950
    %v991 = vunpack.c.l.b16 %v951
    %v992 = vunpack.c.l.b16 %v952
    %v993 = vpack.c.b16 %v978, %v977
    %v994 = vpack.c.b16 %v980, %v979
    %v995 = vpack.c.b16 %v982, %v981
    %v996 = vpack.c.b16 %v984, %v983
    %v997 = vpack.c.b16 %v986, %v985
    %v998 = vpack.c.b16 %v988, %v987
    %v999 = vpack.c.b16 %v990, %v989
    %v1000 = vpack.c.b16 %v992, %v991
    %1009 = vmatprep.subr.bf16.mxu0 0
    %1010 = vmatpush1.bf16.msra.mxu0 %v993
    %1011 = vmatprep.subr.bf16.mxu0 0
    %1012 = vmatpush1.bf16.msra.mxu0 %v994
    %1013 = vmatprep.subr.bf16.mxu0 0
    %1014 = vmatpush1.bf16.msra.mxu0 %v995
    %1015 = vmatprep.subr.bf16.mxu0 0
    %1016 = vmatpush1.bf16.msra.mxu0 %v996
    %1017 = vmatprep.subr.bf16.mxu0 0
    %1018 = vmatpush1.bf16.msra.mxu0 %v997
    %1019 = vmatprep.subr.bf16.mxu0 0
    %1020 = vmatpush1.bf16.msra.mxu0 %v998
    %1021 = vmatprep.subr.bf16.mxu0 0
    %1022 = vmatpush1.bf16.msra.mxu0 %v999
    %1023 = vmatprep.subr.bf16.mxu0 0
    %1024 = vmatpush1.bf16.msra.mxu0 %v1000
    %1025 = vmatprep.subr.bf16.mxu0 0
    %1026 = vmatpush1.bf16.msra.mxu0 0
    %1027 = vmatprep.subr.bf16.mxu0 0
    %1028 = vmatpush1.bf16.msra.mxu0 0
    %1029 = vmatprep.subr.bf16.mxu0 0
    %1030 = vmatpush1.bf16.msra.mxu0 0
    %1031 = vmatprep.subr.bf16.mxu0 0
    %1032 = vmatpush1.bf16.msra.mxu0 0
    %1033 = vmatprep.subr.bf16.mxu0 0
    %1034 = vmatpush1.bf16.msra.mxu0 0
    %1035 = vmatprep.subr.bf16.mxu0 0
    %1036 = vmatpush1.bf16.msra.mxu0 0
    %1037 = vmatprep.subr.bf16.mxu0 0
    %1038 = vmatpush1.bf16.msra.mxu0 0
    %1039 = vmatprep.subr.bf16.mxu0 0
    %1040 = vmatpush1.bf16.msra.mxu0 0
    %1041 = vmatprep.mubr.bf16.mxu0 0
    %1042 = vmatmul.mubr.bf16.gmra.mrb[0].mxu0 %v928
    %v1043 = vpop.f32.mrb[0].mxu0
    %v1044 = vadd.f32 %v959, %v1043
    %v1045 = vpop.f32.mrb[0].mxu0
    %v1046 = vpop.f32.mrb[0].mxu0
    %v1047 = vadd.f32 %v959, %v1046
    %v1048 = vpop.f32.mrb[0].mxu0
    %1049 = vmatprep.mubr.bf16.mxu0 0
    %1050 = vmatmul.mubr.bf16.gmra.mrb[0].mxu0 %v929
    %v1051 = vpop.f32.mrb[0].mxu0
    %v1052 = vadd.f32 %v959, %v1051
    %v1053 = vpop.f32.mrb[0].mxu0
    %v1054 = vpop.f32.mrb[0].mxu0
    %v1055 = vadd.f32 %v959, %v1054
    %v1056 = vpop.f32.mrb[0].mxu0
    %1057 = vmatprep.mubr.bf16.mxu0 0
    %1058 = vmatmul.mubr.bf16.gmra.mrb[0].mxu0 %v930
    %v1059 = vpop.f32.mrb[0].mxu0
    %v1060 = vadd.f32 %v959, %v1059
    %v1061 = vpop.f32.mrb[0].mxu0
    %v1062 = vpop.f32.mrb[0].mxu0
    %v1063 = vadd.f32 %v959, %v1062
    %v1064 = vpop.f32.mrb[0].mxu0
    %1065 = vmatprep.mubr.bf16.mxu0 0
    %1066 = vmatmul.mubr.bf16.gmra.mrb[0].mxu0 %v931
    %v1067 = vpop.f32.mrb[0].mxu0
    %v1068 = vadd.f32 %v959, %v1067
    %v1069 = vpop.f32.mrb[0].mxu0
    %v1070 = vpop.f32.mrb[0].mxu0
    %v1071 = vadd.f32 %v959, %v1070
    %v1072 = vpop.f32.mrb[0].mxu0
    %1073 = vmatprep.mubr.bf16.mxu0 0
    %1074 = vmatmul.mubr.bf16.gmra.mrb[0].mxu0 %v932
    %v1075 = vpop.f32.mrb[0].mxu0
    %v1076 = vadd.f32 %v959, %v1075
    %v1077 = vpop.f32.mrb[0].mxu0
    %v1078 = vpop.f32.mrb[0].mxu0
    %v1079 = vadd.f32 %v959, %v1078
    %v1080 = vpop.f32.mrb[0].mxu0
    %1081 = vmatprep.mubr.bf16.mxu0 0
    %1082 = vmatmul.mubr.bf16.gmra.mrb[0].mxu0 %v933
    %v1083 = vpop.f32.mrb[0].mxu0
    %v1084 = vadd.f32 %v959, %v1083
    %v1085 = vpop.f32.mrb[0].mxu0
    %v1086 = vpop.f32.mrb[0].mxu0
    %v1087 = vadd.f32 %v959, %v1086
    %v1088 = vpop.f32.mrb[0].mxu0
    %1089 = vmatprep.mubr.bf16.mxu0 0
    %1090 = vmatmul.mubr.bf16.gmra.mrb[0].mxu0 %v934
    %v1091 = vpop.f32.mrb[0].mxu0
    %v1092 = vadd.f32 %v959, %v1091
    %v1093 = vpop.f32.mrb[0].mxu0
    %v1094 = vpop.f32.mrb[0].mxu0
    %v1095 = vadd.f32 %v959, %v1094
    %v1096 = vpop.f32.mrb[0].mxu0
    %1097 = vmatprep.mubr.bf16.mxu0 0
    %1098 = vmatmul.mubr.bf16.gmra.mrb[0].mxu0 %v935
    %v1099 = vpop.f32.mrb[0].mxu0
    %v1100 = vadd.f32 %v959, %v1099
    %v1101 = vpop.f32.mrb[0].mxu0
    %v1102 = vpop.f32.mrb[0].mxu0
    %v1103 = vadd.f32 %v959, %v1102
    %v1104 = vpop.f32.mrb[0].mxu0
    %1105 = vdwg.mxu0
    %v1106 = vmax.f32 %v1044, 0.0
    %v1107 = vmax.f32 %v1047, 0.0
    %v1108 = vmax.f32 %v1052, 0.0
    %v1109 = vmax.f32 %v1055, 0.0
    %v1110 = vmax.f32 %v1060, 0.0
    %v1111 = vmax.f32 %v1063, 0.0
    %v1112 = vmax.f32 %v1068, 0.0
    %v1113 = vmax.f32 %v1071, 0.0
    %v1114 = vmax.f32 %v1076, 0.0
    %v1115 = vmax.f32 %v1079, 0.0
    %v1116 = vmax.f32 %v1084, 0.0
    %v1117 = vmax.f32 %v1087, 0.0
    %v1118 = vmax.f32 %v1092, 0.0
    %v1119 = vmax.f32 %v1095, 0.0
    %v1120 = vmax.f32 %v1100, 0.0
    %v1121 = vmax.f32 %v1103, 0.0
    %v1122 = vpack.c.bf16 %v1107, %v1106
    %v1123 = vpack.c.bf16 %v1109, %v1108
    %v1124 = vpack.c.bf16 %v1111, %v1110
    %v1125 = vpack.c.bf16 %v1113, %v1112
    %v1126 = vpack.c.bf16 %v1115, %v1114
    %v1127 = vpack.c.bf16 %v1117, %v1116
    %v1128 = vpack.c.bf16 %v1119, %v1118
    %v1129 = vpack.c.bf16 %v1121, %v1120
    %s1130 = scalar_lea.vmem [#allocation9], 64
    %v1131 = vld [vmem:[%s1130] sm:$0xf]
    %v1132 = vld [vmem:[%s1130 + $0x4] sm:$0xf]
    %v1133 = vld [vmem:[%s1130 + $0x8] sm:$0xf]
    %v1134 = vld [vmem:[%s1130 + $0xc] sm:$0xf]
    %v1135 = vld [vmem:[%s1130 + $0x10] sm:$0xf]
    %v1136 = vld [vmem:[%s1130 + $0x14] sm:$0xf]
    %v1137 = vld [vmem:[%s1130 + $0x18] sm:$0xf]
    %v1138 = vld [vmem:[%s1130 + $0x1c] sm:$0xf]
    %v1139 = vld [vmem:[%s1130 + $0x20] sm:$0xf]
    %v1140 = vld [vmem:[%s1130 + $0x24] sm:$0xf]
    %v1141 = vld [vmem:[%s1130 + $0x28] sm:$0xf]
    %v1142 = vld [vmem:[%s1130 + $0x2c] sm:$0xf]
    %v1143 = vld [vmem:[%s1130 + $0x30] sm:$0xf]
    %v1144 = vld [vmem:[%s1130 + $0x34] sm:$0xf]
    %v1145 = vld [vmem:[%s1130 + $0x38] sm:$0xf]
    %v1146 = vld [vmem:[%s1130 + $0x3c] sm:$0xf]
    %s1147 = scalar_lea.vmem %s5, 1
    %v1148 = vld [vmem:[%s1147] sm:$0x1]
    %v1150 = vlaneseq
    %v1151 = vshrl.u32 %v1150, 7
    %v1152 = vsub.s32 0, %v1151
    %v1153 = vrot.slane %v1148, %v1152
    %v1171 = vunpack.c.l.b16 %v1131
    %v1172 = vunpack.c.l.b16 %v1132
    %v1173 = vunpack.c.l.b16 %v1133
    %v1174 = vunpack.c.l.b16 %v1134
    %v1175 = vunpack.c.l.b16 %v1135
    %v1176 = vunpack.c.l.b16 %v1136
    %v1177 = vunpack.c.l.b16 %v1137
    %v1178 = vunpack.c.l.b16 %v1138
    %v1179 = vunpack.c.l.b16 %v1139
    %v1180 = vunpack.c.l.b16 %v1140
    %v1181 = vunpack.c.l.b16 %v1141
    %v1182 = vunpack.c.l.b16 %v1142
    %v1183 = vunpack.c.l.b16 %v1143
    %v1184 = vunpack.c.l.b16 %v1144
    %v1185 = vunpack.c.l.b16 %v1145
    %v1186 = vunpack.c.l.b16 %v1146
    %v1187 = vpack.c.b16 %v1172, %v1171
    %v1188 = vpack.c.b16 %v1174, %v1173
    %v1189 = vpack.c.b16 %v1176, %v1175
    %v1190 = vpack.c.b16 %v1178, %v1177
    %v1191 = vpack.c.b16 %v1180, %v1179
    %v1192 = vpack.c.b16 %v1182, %v1181
    %v1193 = vpack.c.b16 %v1184, %v1183
    %v1194 = vpack.c.b16 %v1186, %v1185
    %1203 = vmatprep.subr.bf16.mxu0 0
    %1204 = vmatpush1.bf16.msra.mxu0 %v1187
    %1205 = vmatprep.subr.bf16.mxu0 0
    %1206 = vmatpush1.bf16.msra.mxu0 %v1188
    %1207 = vmatprep.subr.bf16.mxu0 0
    %1208 = vmatpush1.bf16.msra.mxu0 %v1189
    %1209 = vmatprep.subr.bf16.mxu0 0
    %1210 = vmatpush1.bf16.msra.mxu0 %v1190
    %1211 = vmatprep.subr.bf16.mxu0 0
    %1212 = vmatpush1.bf16.msra.mxu0 %v1191
    %1213 = vmatprep.subr.bf16.mxu0 0
    %1214 = vmatpush1.bf16.msra.mxu0 %v1192
    %1215 = vmatprep.subr.bf16.mxu0 0
    %1216 = vmatpush1.bf16.msra.mxu0 %v1193
    %1217 = vmatprep.subr.bf16.mxu0 0
    %1218 = vmatpush1.bf16.msra.mxu0 %v1194
    %1219 = vmatprep.subr.bf16.mxu0 0
    %1220 = vmatpush1.bf16.msra.mxu0 0
    %1221 = vmatprep.subr.bf16.mxu0 0
    %1222 = vmatpush1.bf16.msra.mxu0 0
    %1223 = vmatprep.subr.bf16.mxu0 0
    %1224 = vmatpush1.bf16.msra.mxu0 0
    %1225 = vmatprep.subr.bf16.mxu0 0
    %1226 = vmatpush1.bf16.msra.mxu0 0
    %1227 = vmatprep.subr.bf16.mxu0 0
    %1228 = vmatpush1.bf16.msra.mxu0 0
    %1229 = vmatprep.subr.bf16.mxu0 0
    %1230 = vmatpush1.bf16.msra.mxu0 0
    %1231 = vmatprep.subr.bf16.mxu0 0
    %1232 = vmatpush1.bf16.msra.mxu0 0
    %1233 = vmatprep.subr.bf16.mxu0 0
    %1234 = vmatpush1.bf16.msra.mxu0 0
    %1235 = vmatprep.mubr.bf16.mxu0 0
    %1236 = vmatmul.mubr.bf16.gmra.mrb[0].mxu0 %v1122
    %v1237 = vpop.f32.mrb[0].mxu0
    %v1238 = vadd.f32 %v1153, %v1237
    %v1239 = vpop.f32.mrb[0].mxu0
    %v1240 = vpop.f32.mrb[0].mxu0
    %v1241 = vadd.f32 %v1153, %v1240
    %v1242 = vpop.f32.mrb[0].mxu0
    %1243 = vmatprep.mubr.bf16.mxu0 0
    %1244 = vmatmul.mubr.bf16.gmra.mrb[0].mxu0 %v1123
    %v1245 = vpop.f32.mrb[0].mxu0
    %v1246 = vadd.f32 %v1153, %v1245
    %v1247 = vpop.f32.mrb[0].mxu0
    %v1248 = vpop.f32.mrb[0].mxu0
    %v1249 = vadd.f32 %v1153, %v1248
    %v1250 = vpop.f32.mrb[0].mxu0
    %1251 = vmatprep.mubr.bf16.mxu0 0
    %1252 = vmatmul.mubr.bf16.gmra.mrb[0].mxu0 %v1124
    %v1253 = vpop.f32.mrb[0].mxu0
    %v1254 = vadd.f32 %v1153, %v1253
    %v1255 = vpop.f32.mrb[0].mxu0
    %v1256 = vpop.f32.mrb[0].mxu0
    %v1257 = vadd.f32 %v1153, %v1256
    %v1258 = vpop.f32.mrb[0].mxu0
    %1259 = vmatprep.mubr.bf16.mxu0 0
    %1260 = vmatmul.mubr.bf16.gmra.mrb[0].mxu0 %v1125
    %v1261 = vpop.f32.mrb[0].mxu0
    %v1262 = vadd.f32 %v1153, %v1261
    %v1263 = vpop.f32.mrb[0].mxu0
    %v1264 = vpop.f32.mrb[0].mxu0
    %v1265 = vadd.f32 %v1153, %v1264
    %v1266 = vpop.f32.mrb[0].mxu0
    %1267 = vmatprep.mubr.bf16.mxu0 0
    %1268 = vmatmul.mubr.bf16.gmra.mrb[0].mxu0 %v1126
    %v1269 = vpop.f32.mrb[0].mxu0
    %v1270 = vadd.f32 %v1153, %v1269
    %v1271 = vpop.f32.mrb[0].mxu0
    %v1272 = vpop.f32.mrb[0].mxu0
    %v1273 = vadd.f32 %v1153, %v1272
    %v1274 = vpop.f32.mrb[0].mxu0
    %1275 = vmatprep.mubr.bf16.mxu0 0
    %1276 = vmatmul.mubr.bf16.gmra.mrb[0].mxu0 %v1127
    %v1277 = vpop.f32.mrb[0].mxu0
    %v1278 = vadd.f32 %v1153, %v1277
    %v1279 = vpop.f32.mrb[0].mxu0
    %v1280 = vpop.f32.mrb[0].mxu0
    %v1281 = vadd.f32 %v1153, %v1280
    %v1282 = vpop.f32.mrb[0].mxu0
    %1283 = vmatprep.mubr.bf16.mxu0 0
    %1284 = vmatmul.mubr.bf16.gmra.mrb[0].mxu0 %v1128
    %v1285 = vpop.f32.mrb[0].mxu0
    %v1286 = vadd.f32 %v1153, %v1285
    %v1287 = vpop.f32.mrb[0].mxu0
    %v1288 = vpop.f32.mrb[0].mxu0
    %v1289 = vadd.f32 %v1153, %v1288
    %v1290 = vpop.f32.mrb[0].mxu0
    %1291 = vmatprep.mubr.bf16.mxu0 0
    %1292 = vmatmul.mubr.bf16.gmra.mrb[0].mxu0 %v1129
    %v1293 = vpop.f32.mrb[0].mxu0
    %v1294 = vadd.f32 %v1153, %v1293
    %v1295 = vpop.f32.mrb[0].mxu0
    %v1296 = vpop.f32.mrb[0].mxu0
    %v1297 = vadd.f32 %v1153, %v1296
    %v1298 = vpop.f32.mrb[0].mxu0
    %1299 = vdwg.mxu0
    %v1300 = vmax.f32 %v1238, 0.0
    %v1301 = vmax.f32 %v1241, 0.0
    %v1302 = vmax.f32 %v1246, 0.0
    %v1303 = vmax.f32 %v1249, 0.0
    %v1304 = vmax.f32 %v1254, 0.0
    %v1305 = vmax.f32 %v1257, 0.0
    %v1306 = vmax.f32 %v1262, 0.0
    %v1307 = vmax.f32 %v1265, 0.0
    %v1308 = vmax.f32 %v1270, 0.0
    %v1309 = vmax.f32 %v1273, 0.0
    %v1310 = vmax.f32 %v1278, 0.0
    %v1311 = vmax.f32 %v1281, 0.0
    %v1312 = vmax.f32 %v1286, 0.0
    %v1313 = vmax.f32 %v1289, 0.0
    %v1314 = vmax.f32 %v1294, 0.0
    %v1315 = vmax.f32 %v1297, 0.0
    %s1316 = scalar_lea.vmem %s6, 1
    %v1317 = vld [vmem:[%s1316] sm:$0x1]
    %v1319 = vlaneseq
    %v1320 = vshrl.u32 %v1319, 7
    %v1321 = vsub.s32 0, %v1320
    %v1322 = vrot.slane %v1317, %v1321
    %v1324 = vmul.f32 %v1300, %v1322
    %v1325 = vmul.f32 %v1301, %v1322
    %v1326 = vmul.f32 %v1302, %v1322
    %v1327 = vmul.f32 %v1303, %v1322
    %v1328 = vmul.f32 %v1304, %v1322
    %v1329 = vmul.f32 %v1305, %v1322
    %v1330 = vmul.f32 %v1306, %v1322
    %v1331 = vmul.f32 %v1307, %v1322
    %v1332 = vmul.f32 %v1308, %v1322
    %v1333 = vmul.f32 %v1309, %v1322
    %v1334 = vmul.f32 %v1310, %v1322
    %v1335 = vmul.f32 %v1311, %v1322
    %v1336 = vmul.f32 %v1312, %v1322
    %v1337 = vmul.f32 %v1313, %v1322
    %v1338 = vmul.f32 %v1314, %v1322
    %v1339 = vmul.f32 %v1315, %v1322
    %s1340 = scalar_lea.vmem %s7, 1
    %v1341 = vld [vmem:[%s1340] sm:$0x1]
    %v1343 = vlaneseq
    %v1344 = vshrl.u32 %v1343, 7
    %v1345 = vsub.s32 0, %v1344
    %v1346 = vrot.slane %v1341, %v1345
    %v1348 = vadd.f32 %v1324, %v1346
    %v1349 = vadd.f32 %v1325, %v1346
    %v1350 = vadd.f32 %v1326, %v1346
    %v1351 = vadd.f32 %v1327, %v1346
    %v1352 = vadd.f32 %v1328, %v1346
    %v1353 = vadd.f32 %v1329, %v1346
    %v1354 = vadd.f32 %v1330, %v1346
    %v1355 = vadd.f32 %v1331, %v1346
    %v1356 = vadd.f32 %v1332, %v1346
    %v1357 = vadd.f32 %v1333, %v1346
    %v1358 = vadd.f32 %v1334, %v1346
    %v1359 = vadd.f32 %v1335, %v1346
    %v1360 = vadd.f32 %v1336, %v1346
    %v1361 = vadd.f32 %v1337, %v1346
    %v1362 = vadd.f32 %v1338, %v1346
    %v1363 = vadd.f32 %v1339, %v1346
    %v1364 = vpack.c.bf16 %v1349, %v1348
    %v1365 = vpack.c.bf16 %v1351, %v1350
    %v1366 = vpack.c.bf16 %v1353, %v1352
    %v1367 = vpack.c.bf16 %v1355, %v1354
    %v1368 = vpack.c.bf16 %v1357, %v1356
    %v1369 = vpack.c.bf16 %v1359, %v1358
    %v1370 = vpack.c.bf16 %v1361, %v1360
    %v1371 = vpack.c.bf16 %v1363, %v1362
    %1372 = vst [vmem:[#allocation2 + $0x8] sm:$0xff] %v1364
    %1373 = vst [vmem:[#allocation2 + $0x20] sm:$0xff] %v1365
    %1374 = vst [vmem:[#allocation2 + $0x38] sm:$0xff] %v1366
    %1375 = vst [vmem:[#allocation2 + $0x50] sm:$0xff] %v1367
    %1376 = vst [vmem:[#allocation2 + $0x68] sm:$0xff] %v1368
    %1377 = vst [vmem:[#allocation2 + $0x80] sm:$0xff] %v1369
    %1378 = vst [vmem:[#allocation2 + $0x98] sm:$0xff] %v1370
    %1379 = vst [vmem:[#allocation2 + $0xb0] sm:$0xff] %v1371
    %v1380 = vunpack.c.l.bf16 %v1364
    %v1381 = vunpack.c.h.bf16 %v1364
    %v1382 = vunpack.c.l.bf16 %v1365
    %v1383 = vunpack.c.h.bf16 %v1365
    %v1384 = vunpack.c.l.bf16 %v1366
    %v1385 = vunpack.c.h.bf16 %v1366
    %v1386 = vunpack.c.l.bf16 %v1367
    %v1387 = vunpack.c.h.bf16 %v1367
    %v1388 = vunpack.c.l.bf16 %v1368
    %v1389 = vunpack.c.h.bf16 %v1368
    %v1390 = vunpack.c.l.bf16 %v1369
    %v1391 = vunpack.c.h.bf16 %v1369
    %v1392 = vunpack.c.l.bf16 %v1370
    %v1393 = vunpack.c.h.bf16 %v1370
    %v1394 = vunpack.c.l.bf16 %v1371
    %v1395 = vunpack.c.h.bf16 %v1371
    %1396 = vmatprep.subr.bf16.mxu0 0
    %1397 = vmatpush1.bf16.msra.mxu0 %v1364
    %1398 = vmatprep.subr.bf16.mxu0 0
    %1399 = vmatpush1.bf16.msra.mxu0 %v1365
    %1400 = vmatprep.subr.bf16.mxu0 0
    %1401 = vmatpush1.bf16.msra.mxu0 %v1366
    %1402 = vmatprep.subr.bf16.mxu0 0
    %1403 = vmatpush1.bf16.msra.mxu0 %v1367
    %1404 = vmatprep.subr.bf16.mxu0 0
    %1405 = vmatpush1.bf16.msra.mxu0 %v1368
    %1406 = vmatprep.subr.bf16.mxu0 0
    %1407 = vmatpush1.bf16.msra.mxu0 %v1369
    %1408 = vmatprep.subr.bf16.mxu0 0
    %1409 = vmatpush1.bf16.msra.mxu0 %v1370
    %1410 = vmatprep.subr.bf16.mxu0 0
    %1411 = vmatpush1.bf16.msra.mxu0 %v1371
    %1412 = vmatprep.subr.bf16.mxu0 0
    %1413 = vmatpush1.bf16.msra.mxu0 0
    %1414 = vmatprep.subr.bf16.mxu0 0
    %1415 = vmatpush1.bf16.msra.mxu0 0
    %1416 = vmatprep.subr.bf16.mxu0 0
    %1417 = vmatpush1.bf16.msra.mxu0 0
    %1418 = vmatprep.subr.bf16.mxu0 0
    %1419 = vmatpush1.bf16.msra.mxu0 0
    %1420 = vmatprep.subr.bf16.mxu0 0
    %1421 = vmatpush1.bf16.msra.mxu0 0
    %1422 = vmatprep.subr.bf16.mxu0 0
    %1423 = vmatpush1.bf16.msra.mxu0 0
    %1424 = vmatprep.subr.bf16.mxu0 0
    %1425 = vmatpush1.bf16.msra.mxu0 0
    %1426 = vmatprep.subr.bf16.mxu0 0
    %1427 = vmatpush1.bf16.msra.mxu0 0
    %1428 = vmatprep.mubr.bf16.mxu0 0
    %1429 = vmatmul.mubr.bf16.gmra.mrb[0].mxu0 %v208
    %v1430 = vpop.f32.mrb[0].mxu0
    %v1431 = vadd.f32 %v1380, %v1430
    %v1432 = vpop.f32.mrb[0].mxu0
    %v1433 = vpop.f32.mrb[0].mxu0
    %v1434 = vadd.f32 %v1381, %v1433
    %v1435 = vpop.f32.mrb[0].mxu0
    %1436 = vmatprep.mubr.bf16.mxu0 0
    %1437 = vmatmul.mubr.bf16.gmra.mrb[0].mxu0 %v209
    %v1438 = vpop.f32.mrb[0].mxu0
    %v1439 = vadd.f32 %v1382, %v1438
    %v1440 = vpop.f32.mrb[0].mxu0
    %v1441 = vpop.f32.mrb[0].mxu0
    %v1442 = vadd.f32 %v1383, %v1441
    %v1443 = vpop.f32.mrb[0].mxu0
    %1444 = vmatprep.mubr.bf16.mxu0 0
    %1445 = vmatmul.mubr.bf16.gmra.mrb[0].mxu0 %v210
    %v1446 = vpop.f32.mrb[0].mxu0
    %v1447 = vadd.f32 %v1384, %v1446
    %v1448 = vpop.f32.mrb[0].mxu0
    %v1449 = vpop.f32.mrb[0].mxu0
    %v1450 = vadd.f32 %v1385, %v1449
    %v1451 = vpop.f32.mrb[0].mxu0
    %1452 = vmatprep.mubr.bf16.mxu0 0
    %1453 = vmatmul.mubr.bf16.gmra.mrb[0].mxu0 %v211
    %v1454 = vpop.f32.mrb[0].mxu0
    %v1455 = vadd.f32 %v1386, %v1454
    %v1456 = vpop.f32.mrb[0].mxu0
    %v1457 = vpop.f32.mrb[0].mxu0
    %v1458 = vadd.f32 %v1387, %v1457
    %v1459 = vpop.f32.mrb[0].mxu0
    %1460 = vmatprep.mubr.bf16.mxu0 0
    %1461 = vmatmul.mubr.bf16.gmra.mrb[0].mxu0 %v212
    %v1462 = vpop.f32.mrb[0].mxu0
    %v1463 = vadd.f32 %v1388, %v1462
    %v1464 = vpop.f32.mrb[0].mxu0
    %v1465 = vpop.f32.mrb[0].mxu0
    %v1466 = vadd.f32 %v1389, %v1465
    %v1467 = vpop.f32.mrb[0].mxu0
    %1468 = vmatprep.mubr.bf16.mxu0 0
    %1469 = vmatmul.mubr.bf16.gmra.mrb[0].mxu0 %v213
    %v1470 = vpop.f32.mrb[0].mxu0
    %v1471 = vadd.f32 %v1390, %v1470
    %v1472 = vpop.f32.mrb[0].mxu0
    %v1473 = vpop.f32.mrb[0].mxu0
    %v1474 = vadd.f32 %v1391, %v1473
    %v1475 = vpop.f32.mrb[0].mxu0
    %1476 = vmatprep.mubr.bf16.mxu0 0
    %1477 = vmatmul.mubr.bf16.gmra.mrb[0].mxu0 %v214
    %v1478 = vpop.f32.mrb[0].mxu0
    %v1479 = vadd.f32 %v1392, %v1478
    %v1480 = vpop.f32.mrb[0].mxu0
    %v1481 = vpop.f32.mrb[0].mxu0
    %v1482 = vadd.f32 %v1393, %v1481
    %v1483 = vpop.f32.mrb[0].mxu0
    %1484 = vmatprep.mubr.bf16.mxu0 0
    %1485 = vmatmul.mubr.bf16.gmra.mrb[0].mxu0 %v215
    %v1486 = vpop.f32.mrb[0].mxu0
    %v1487 = vadd.f32 %v1394, %v1486
    %v1488 = vpop.f32.mrb[0].mxu0
    %v1489 = vpop.f32.mrb[0].mxu0
    %v1490 = vadd.f32 %v1395, %v1489
    %v1491 = vpop.f32.mrb[0].mxu0
    %1492 = vdwg.mxu0
    %v1493 = vpack.c.bf16 %v1434, %v1431
    %v1494 = vpack.c.bf16 %v1442, %v1439
    %v1495 = vpack.c.bf16 %v1450, %v1447
    %v1496 = vpack.c.bf16 %v1458, %v1455
    %v1497 = vpack.c.bf16 %v1466, %v1463
    %v1498 = vpack.c.bf16 %v1474, %v1471
    %v1499 = vpack.c.bf16 %v1482, %v1479
    %v1500 = vpack.c.bf16 %v1490, %v1487
    %s1501 = scalar_lea.vmem [#allocation8], 128
    %v1502 = vld [vmem:[%s1501] sm:$0xf]
    %v1503 = vld [vmem:[%s1501 + $0x4] sm:$0xf]
    %v1504 = vld [vmem:[%s1501 + $0x8] sm:$0xf]
    %v1505 = vld [vmem:[%s1501 + $0xc] sm:$0xf]
    %v1506 = vld [vmem:[%s1501 + $0x10] sm:$0xf]
    %v1507 = vld [vmem:[%s1501 + $0x14] sm:$0xf]
    %v1508 = vld [vmem:[%s1501 + $0x18] sm:$0xf]
    %v1509 = vld [vmem:[%s1501 + $0x1c] sm:$0xf]
    %v1510 = vld [vmem:[%s1501 + $0x20] sm:$0xf]
    %v1511 = vld [vmem:[%s1501 + $0x24] sm:$0xf]
    %v1512 = vld [vmem:[%s1501 + $0x28] sm:$0xf]
    %v1513 = vld [vmem:[%s1501 + $0x2c] sm:$0xf]
    %v1514 = vld [vmem:[%s1501 + $0x30] sm:$0xf]
    %v1515 = vld [vmem:[%s1501 + $0x34] sm:$0xf]
    %v1516 = vld [vmem:[%s1501 + $0x38] sm:$0xf]
    %v1517 = vld [vmem:[%s1501 + $0x3c] sm:$0xf]
    %s1518 = scalar_lea.vmem %s3, 2
    %v1519 = vld [vmem:[%s1518] sm:$0x1]
    %v1521 = vlaneseq
    %v1522 = vshrl.u32 %v1521, 7
    %v1523 = vsub.s32 0, %v1522
    %v1524 = vrot.slane %v1519, %v1523
    %v1542 = vunpack.c.l.b16 %v1502
    %v1543 = vunpack.c.l.b16 %v1503
    %v1544 = vunpack.c.l.b16 %v1504
    %v1545 = vunpack.c.l.b16 %v1505
    %v1546 = vunpack.c.l.b16 %v1506
    %v1547 = vunpack.c.l.b16 %v1507
    %v1548 = vunpack.c.l.b16 %v1508
    %v1549 = vunpack.c.l.b16 %v1509
    %v1550 = vunpack.c.l.b16 %v1510
    %v1551 = vunpack.c.l.b16 %v1511
    %v1552 = vunpack.c.l.b16 %v1512
    %v1553 = vunpack.c.l.b16 %v1513
    %v1554 = vunpack.c.l.b16 %v1514
    %v1555 = vunpack.c.l.b16 %v1515
    %v1556 = vunpack.c.l.b16 %v1516
    %v1557 = vunpack.c.l.b16 %v1517
    %v1558 = vpack.c.b16 %v1543, %v1542
    %v1559 = vpack.c.b16 %v1545, %v1544
    %v1560 = vpack.c.b16 %v1547, %v1546
    %v1561 = vpack.c.b16 %v1549, %v1548
    %v1562 = vpack.c.b16 %v1551, %v1550
    %v1563 = vpack.c.b16 %v1553, %v1552
    %v1564 = vpack.c.b16 %v1555, %v1554
    %v1565 = vpack.c.b16 %v1557, %v1556
    %1574 = vmatprep.subr.bf16.mxu0 0
    %1575 = vmatpush1.bf16.msra.mxu0 %v1558
    %1576 = vmatprep.subr.bf16.mxu0 0
    %1577 = vmatpush1.bf16.msra.mxu0 %v1559
    %1578 = vmatprep.subr.bf16.mxu0 0
    %1579 = vmatpush1.bf16.msra.mxu0 %v1560
    %1580 = vmatprep.subr.bf16.mxu0 0
    %1581 = vmatpush1.bf16.msra.mxu0 %v1561
    %1582 = vmatprep.subr.bf16.mxu0 0
    %1583 = vmatpush1.bf16.msra.mxu0 %v1562
    %1584 = vmatprep.subr.bf16.mxu0 0
    %1585 = vmatpush1.bf16.msra.mxu0 %v1563
    %1586 = vmatprep.subr.bf16.mxu0 0
    %1587 = vmatpush1.bf16.msra.mxu0 %v1564
    %1588 = vmatprep.subr.bf16.mxu0 0
    %1589 = vmatpush1.bf16.msra.mxu0 %v1565
    %1590 = vmatprep.subr.bf16.mxu0 0
    %1591 = vmatpush1.bf16.msra.mxu0 0
    %1592 = vmatprep.subr.bf16.mxu0 0
    %1593 = vmatpush1.bf16.msra.mxu0 0
    %1594 = vmatprep.subr.bf16.mxu0 0
    %1595 = vmatpush1.bf16.msra.mxu0 0
    %1596 = vmatprep.subr.bf16.mxu0 0
    %1597 = vmatpush1.bf16.msra.mxu0 0
    %1598 = vmatprep.subr.bf16.mxu0 0
    %1599 = vmatpush1.bf16.msra.mxu0 0
    %1600 = vmatprep.subr.bf16.mxu0 0
    %1601 = vmatpush1.bf16.msra.mxu0 0
    %1602 = vmatprep.subr.bf16.mxu0 0
    %1603 = vmatpush1.bf16.msra.mxu0 0
    %1604 = vmatprep.subr.bf16.mxu0 0
    %1605 = vmatpush1.bf16.msra.mxu0 0
    %1606 = vmatprep.mubr.bf16.mxu0 0
    %1607 = vmatmul.mubr.bf16.gmra.mrb[0].mxu0 %v1493
    %v1608 = vpop.f32.mrb[0].mxu0
    %v1609 = vadd.f32 %v1524, %v1608
    %v1610 = vpop.f32.mrb[0].mxu0
    %v1611 = vpop.f32.mrb[0].mxu0
    %v1612 = vadd.f32 %v1524, %v1611
    %v1613 = vpop.f32.mrb[0].mxu0
    %1614 = vmatprep.mubr.bf16.mxu0 0
    %1615 = vmatmul.mubr.bf16.gmra.mrb[0].mxu0 %v1494
    %v1616 = vpop.f32.mrb[0].mxu0
    %v1617 = vadd.f32 %v1524, %v1616
    %v1618 = vpop.f32.mrb[0].mxu0
    %v1619 = vpop.f32.mrb[0].mxu0
    %v1620 = vadd.f32 %v1524, %v1619
    %v1621 = vpop.f32.mrb[0].mxu0
    %1622 = vmatprep.mubr.bf16.mxu0 0
    %1623 = vmatmul.mubr.bf16.gmra.mrb[0].mxu0 %v1495
    %v1624 = vpop.f32.mrb[0].mxu0
    %v1625 = vadd.f32 %v1524, %v1624
    %v1626 = vpop.f32.mrb[0].mxu0
    %v1627 = vpop.f32.mrb[0].mxu0
    %v1628 = vadd.f32 %v1524, %v1627
    %v1629 = vpop.f32.mrb[0].mxu0
    %1630 = vmatprep.mubr.bf16.mxu0 0
    %1631 = vmatmul.mubr.bf16.gmra.mrb[0].mxu0 %v1496
    %v1632 = vpop.f32.mrb[0].mxu0
    %v1633 = vadd.f32 %v1524, %v1632
    %v1634 = vpop.f32.mrb[0].mxu0
    %v1635 = vpop.f32.mrb[0].mxu0
    %v1636 = vadd.f32 %v1524, %v1635
    %v1637 = vpop.f32.mrb[0].mxu0
    %1638 = vmatprep.mubr.bf16.mxu0 0
    %1639 = vmatmul.mubr.bf16.gmra.mrb[0].mxu0 %v1497
    %v1640 = vpop.f32.mrb[0].mxu0
    %v1641 = vadd.f32 %v1524, %v1640
    %v1642 = vpop.f32.mrb[0].mxu0
    %v1643 = vpop.f32.mrb[0].mxu0
    %v1644 = vadd.f32 %v1524, %v1643
    %v1645 = vpop.f32.mrb[0].mxu0
    %1646 = vmatprep.mubr.bf16.mxu0 0
    %1647 = vmatmul.mubr.bf16.gmra.mrb[0].mxu0 %v1498
    %v1648 = vpop.f32.mrb[0].mxu0
    %v1649 = vadd.f32 %v1524, %v1648
    %v1650 = vpop.f32.mrb[0].mxu0
    %v1651 = vpop.f32.mrb[0].mxu0
    %v1652 = vadd.f32 %v1524, %v1651
    %v1653 = vpop.f32.mrb[0].mxu0
    %1654 = vmatprep.mubr.bf16.mxu0 0
    %1655 = vmatmul.mubr.bf16.gmra.mrb[0].mxu0 %v1499
    %v1656 = vpop.f32.mrb[0].mxu0
    %v1657 = vadd.f32 %v1524, %v1656
    %v1658 = vpop.f32.mrb[0].mxu0
    %v1659 = vpop.f32.mrb[0].mxu0
    %v1660 = vadd.f32 %v1524, %v1659
    %v1661 = vpop.f32.mrb[0].mxu0
    %1662 = vmatprep.mubr.bf16.mxu0 0
    %1663 = vmatmul.mubr.bf16.gmra.mrb[0].mxu0 %v1500
    %v1664 = vpop.f32.mrb[0].mxu0
    %v1665 = vadd.f32 %v1524, %v1664
    %v1666 = vpop.f32.mrb[0].mxu0
    %v1667 = vpop.f32.mrb[0].mxu0
    %v1668 = vadd.f32 %v1524, %v1667
    %v1669 = vpop.f32.mrb[0].mxu0
    %1670 = vdwg.mxu0
    %v1671 = vmax.f32 %v1609, 0.0
    %v1672 = vmax.f32 %v1612, 0.0
    %v1673 = vmax.f32 %v1617, 0.0
    %v1674 = vmax.f32 %v1620, 0.0
    %v1675 = vmax.f32 %v1625, 0.0
    %v1676 = vmax.f32 %v1628, 0.0
    %v1677 = vmax.f32 %v1633, 0.0
    %v1678 = vmax.f32 %v1636, 0.0
    %v1679 = vmax.f32 %v1641, 0.0
    %v1680 = vmax.f32 %v1644, 0.0
    %v1681 = vmax.f32 %v1649, 0.0
    %v1682 = vmax.f32 %v1652, 0.0
    %v1683 = vmax.f32 %v1657, 0.0
    %v1684 = vmax.f32 %v1660, 0.0
    %v1685 = vmax.f32 %v1665, 0.0
    %v1686 = vmax.f32 %v1668, 0.0
    %v1687 = vpack.c.bf16 %v1672, %v1671
    %v1688 = vpack.c.bf16 %v1674, %v1673
    %v1689 = vpack.c.bf16 %v1676, %v1675
    %v1690 = vpack.c.bf16 %v1678, %v1677
    %v1691 = vpack.c.bf16 %v1680, %v1679
    %v1692 = vpack.c.bf16 %v1682, %v1681
    %v1693 = vpack.c.bf16 %v1684, %v1683
    %v1694 = vpack.c.bf16 %v1686, %v1685
    %s1695 = scalar_lea.vmem [#allocation9], 128
    %v1696 = vld [vmem:[%s1695] sm:$0xf]
    %v1697 = vld [vmem:[%s1695 + $0x4] sm:$0xf]
    %v1698 = vld [vmem:[%s1695 + $0x8] sm:$0xf]
    %v1699 = vld [vmem:[%s1695 + $0xc] sm:$0xf]
    %v1700 = vld [vmem:[%s1695 + $0x10] sm:$0xf]
    %v1701 = vld [vmem:[%s1695 + $0x14] sm:$0xf]
    %v1702 = vld [vmem:[%s1695 + $0x18] sm:$0xf]
    %v1703 = vld [vmem:[%s1695 + $0x1c] sm:$0xf]
    %v1704 = vld [vmem:[%s1695 + $0x20] sm:$0xf]
    %v1705 = vld [vmem:[%s1695 + $0x24] sm:$0xf]
    %v1706 = vld [vmem:[%s1695 + $0x28] sm:$0xf]
    %v1707 = vld [vmem:[%s1695 + $0x2c] sm:$0xf]
    %v1708 = vld [vmem:[%s1695 + $0x30] sm:$0xf]
    %v1709 = vld [vmem:[%s1695 + $0x34] sm:$0xf]
    %v1710 = vld [vmem:[%s1695 + $0x38] sm:$0xf]
    %v1711 = vld [vmem:[%s1695 + $0x3c] sm:$0xf]
    %s1712 = scalar_lea.vmem %s5, 2
    %v1713 = vld [vmem:[%s1712] sm:$0x1]
    %v1715 = vlaneseq
    %v1716 = vshrl.u32 %v1715, 7
    %v1717 = vsub.s32 0, %v1716
    %v1718 = vrot.slane %v1713, %v1717
    %v1736 = vunpack.c.l.b16 %v1696
    %v1737 = vunpack.c.l.b16 %v1697
    %v1738 = vunpack.c.l.b16 %v1698
    %v1739 = vunpack.c.l.b16 %v1699
    %v1740 = vunpack.c.l.b16 %v1700
    %v1741 = vunpack.c.l.b16 %v1701
    %v1742 = vunpack.c.l.b16 %v1702
    %v1743 = vunpack.c.l.b16 %v1703
    %v1744 = vunpack.c.l.b16 %v1704
    %v1745 = vunpack.c.l.b16 %v1705
    %v1746 = vunpack.c.l.b16 %v1706
    %v1747 = vunpack.c.l.b16 %v1707
    %v1748 = vunpack.c.l.b16 %v1708
    %v1749 = vunpack.c.l.b16 %v1709
    %v1750 = vunpack.c.l.b16 %v1710
    %v1751 = vunpack.c.l.b16 %v1711
    %v1752 = vpack.c.b16 %v1737, %v1736
    %v1753 = vpack.c.b16 %v1739, %v1738
    %v1754 = vpack.c.b16 %v1741, %v1740
    %v1755 = vpack.c.b16 %v1743, %v1742
    %v1756 = vpack.c.b16 %v1745, %v1744
    %v1757 = vpack.c.b16 %v1747, %v1746
    %v1758 = vpack.c.b16 %v1749, %v1748
    %v1759 = vpack.c.b16 %v1751, %v1750
    %1768 = vmatprep.subr.bf16.mxu0 0
    %1769 = vmatpush1.bf16.msra.mxu0 %v1752
    %1770 = vmatprep.subr.bf16.mxu0 0
    %1771 = vmatpush1.bf16.msra.mxu0 %v1753
    %1772 = vmatprep.subr.bf16.mxu0 0
    %1773 = vmatpush1.bf16.msra.mxu0 %v1754
    %1774 = vmatprep.subr.bf16.mxu0 0
    %1775 = vmatpush1.bf16.msra.mxu0 %v1755
    %1776 = vmatprep.subr.bf16.mxu0 0
    %1777 = vmatpush1.bf16.msra.mxu0 %v1756
    %1778 = vmatprep.subr.bf16.mxu0 0
    %1779 = vmatpush1.bf16.msra.mxu0 %v1757
    %1780 = vmatprep.subr.bf16.mxu0 0
    %1781 = vmatpush1.bf16.msra.mxu0 %v1758
    %1782 = vmatprep.subr.bf16.mxu0 0
    %1783 = vmatpush1.bf16.msra.mxu0 %v1759
    %1784 = vmatprep.subr.bf16.mxu0 0
    %1785 = vmatpush1.bf16.msra.mxu0 0
    %1786 = vmatprep.subr.bf16.mxu0 0
    %1787 = vmatpush1.bf16.msra.mxu0 0
    %1788 = vmatprep.subr.bf16.mxu0 0
    %1789 = vmatpush1.bf16.msra.mxu0 0
    %1790 = vmatprep.subr.bf16.mxu0 0
    %1791 = vmatpush1.bf16.msra.mxu0 0
    %1792 = vmatprep.subr.bf16.mxu0 0
    %1793 = vmatpush1.bf16.msra.mxu0 0
    %1794 = vmatprep.subr.bf16.mxu0 0
    %1795 = vmatpush1.bf16.msra.mxu0 0
    %1796 = vmatprep.subr.bf16.mxu0 0
    %1797 = vmatpush1.bf16.msra.mxu0 0
    %1798 = vmatprep.subr.bf16.mxu0 0
    %1799 = vmatpush1.bf16.msra.mxu0 0
    %1800 = vmatprep.mubr.bf16.mxu0 0
    %1801 = vmatmul.mubr.bf16.gmra.mrb[0].mxu0 %v1687
    %v1802 = vpop.f32.mrb[0].mxu0
    %v1803 = vadd.f32 %v1718, %v1802
    %v1804 = vpop.f32.mrb[0].mxu0
    %v1805 = vpop.f32.mrb[0].mxu0
    %v1806 = vadd.f32 %v1718, %v1805
    %v1807 = vpop.f32.mrb[0].mxu0
    %1808 = vmatprep.mubr.bf16.mxu0 0
    %1809 = vmatmul.mubr.bf16.gmra.mrb[0].mxu0 %v1688
    %v1810 = vpop.f32.mrb[0].mxu0
    %v1811 = vadd.f32 %v1718, %v1810
    %v1812 = vpop.f32.mrb[0].mxu0
    %v1813 = vpop.f32.mrb[0].mxu0
    %v1814 = vadd.f32 %v1718, %v1813
    %v1815 = vpop.f32.mrb[0].mxu0
    %1816 = vmatprep.mubr.bf16.mxu0 0
    %1817 = vmatmul.mubr.bf16.gmra.mrb[0].mxu0 %v1689
    %v1818 = vpop.f32.mrb[0].mxu0
    %v1819 = vadd.f32 %v1718, %v1818
    %v1820 = vpop.f32.mrb[0].mxu0
    %v1821 = vpop.f32.mrb[0].mxu0
    %v1822 = vadd.f32 %v1718, %v1821
    %v1823 = vpop.f32.mrb[0].mxu0
    %1824 = vmatprep.mubr.bf16.mxu0 0
    %1825 = vmatmul.mubr.bf16.gmra.mrb[0].mxu0 %v1690
    %v1826 = vpop.f32.mrb[0].mxu0
    %v1827 = vadd.f32 %v1718, %v1826
    %v1828 = vpop.f32.mrb[0].mxu0
    %v1829 = vpop.f32.mrb[0].mxu0
    %v1830 = vadd.f32 %v1718, %v1829
    %v1831 = vpop.f32.mrb[0].mxu0
    %1832 = vmatprep.mubr.bf16.mxu0 0
    %1833 = vmatmul.mubr.bf16.gmra.mrb[0].mxu0 %v1691
    %v1834 = vpop.f32.mrb[0].mxu0
    %v1835 = vadd.f32 %v1718, %v1834
    %v1836 = vpop.f32.mrb[0].mxu0
    %v1837 = vpop.f32.mrb[0].mxu0
    %v1838 = vadd.f32 %v1718, %v1837
    %v1839 = vpop.f32.mrb[0].mxu0
    %1840 = vmatprep.mubr.bf16.mxu0 0
    %1841 = vmatmul.mubr.bf16.gmra.mrb[0].mxu0 %v1692
    %v1842 = vpop.f32.mrb[0].mxu0
    %v1843 = vadd.f32 %v1718, %v1842
    %v1844 = vpop.f32.mrb[0].mxu0
    %v1845 = vpop.f32.mrb[0].mxu0
    %v1846 = vadd.f32 %v1718, %v1845
    %v1847 = vpop.f32.mrb[0].mxu0
    %1848 = vmatprep.mubr.bf16.mxu0 0
    %1849 = vmatmul.mubr.bf16.gmra.mrb[0].mxu0 %v1693
    %v1850 = vpop.f32.mrb[0].mxu0
    %v1851 = vadd.f32 %v1718, %v1850
    %v1852 = vpop.f32.mrb[0].mxu0
    %v1853 = vpop.f32.mrb[0].mxu0
    %v1854 = vadd.f32 %v1718, %v1853
    %v1855 = vpop.f32.mrb[0].mxu0
    %1856 = vmatprep.mubr.bf16.mxu0 0
    %1857 = vmatmul.mubr.bf16.gmra.mrb[0].mxu0 %v1694
    %v1858 = vpop.f32.mrb[0].mxu0
    %v1859 = vadd.f32 %v1718, %v1858
    %v1860 = vpop.f32.mrb[0].mxu0
    %v1861 = vpop.f32.mrb[0].mxu0
    %v1862 = vadd.f32 %v1718, %v1861
    %v1863 = vpop.f32.mrb[0].mxu0
    %1864 = vdwg.mxu0
    %v1865 = vmax.f32 %v1803, 0.0
    %v1866 = vmax.f32 %v1806, 0.0
    %v1867 = vmax.f32 %v1811, 0.0
    %v1868 = vmax.f32 %v1814, 0.0
    %v1869 = vmax.f32 %v1819, 0.0
    %v1870 = vmax.f32 %v1822, 0.0
    %v1871 = vmax.f32 %v1827, 0.0
    %v1872 = vmax.f32 %v1830, 0.0
    %v1873 = vmax.f32 %v1835, 0.0
    %v1874 = vmax.f32 %v1838, 0.0
    %v1875 = vmax.f32 %v1843, 0.0
    %v1876 = vmax.f32 %v1846, 0.0
    %v1877 = vmax.f32 %v1851, 0.0
    %v1878 = vmax.f32 %v1854, 0.0
    %v1879 = vmax.f32 %v1859, 0.0
    %v1880 = vmax.f32 %v1862, 0.0
    %s1881 = scalar_lea.vmem %s6, 2
    %v1882 = vld [vmem:[%s1881] sm:$0x1]
    %v1884 = vlaneseq
    %v1885 = vshrl.u32 %v1884, 7
    %v1886 = vsub.s32 0, %v1885
    %v1887 = vrot.slane %v1882, %v1886
    %v1889 = vmul.f32 %v1865, %v1887
    %v1890 = vmul.f32 %v1866, %v1887
    %v1891 = vmul.f32 %v1867, %v1887
    %v1892 = vmul.f32 %v1868, %v1887
    %v1893 = vmul.f32 %v1869, %v1887
    %v1894 = vmul.f32 %v1870, %v1887
    %v1895 = vmul.f32 %v1871, %v1887
    %v1896 = vmul.f32 %v1872, %v1887
    %v1897 = vmul.f32 %v1873, %v1887
    %v1898 = vmul.f32 %v1874, %v1887
    %v1899 = vmul.f32 %v1875, %v1887
    %v1900 = vmul.f32 %v1876, %v1887
    %v1901 = vmul.f32 %v1877, %v1887
    %v1902 = vmul.f32 %v1878, %v1887
    %v1903 = vmul.f32 %v1879, %v1887
    %v1904 = vmul.f32 %v1880, %v1887
    %s1905 = scalar_lea.vmem %s7, 2
    %v1906 = vld [vmem:[%s1905] sm:$0x1]
    %v1908 = vlaneseq
    %v1909 = vshrl.u32 %v1908, 7
    %v1910 = vsub.s32 0, %v1909
    %v1911 = vrot.slane %v1906, %v1910
    %v1913 = vadd.f32 %v1889, %v1911
    %v1914 = vadd.f32 %v1890, %v1911
    %v1915 = vadd.f32 %v1891, %v1911
    %v1916 = vadd.f32 %v1892, %v1911
    %v1917 = vadd.f32 %v1893, %v1911
    %v1918 = vadd.f32 %v1894, %v1911
    %v1919 = vadd.f32 %v1895, %v1911
    %v1920 = vadd.f32 %v1896, %v1911
    %v1921 = vadd.f32 %v1897, %v1911
    %v1922 = vadd.f32 %v1898, %v1911
    %v1923 = vadd.f32 %v1899, %v1911
    %v1924 = vadd.f32 %v1900, %v1911
    %v1925 = vadd.f32 %v1901, %v1911
    %v1926 = vadd.f32 %v1902, %v1911
    %v1927 = vadd.f32 %v1903, %v1911
    %v1928 = vadd.f32 %v1904, %v1911
    %v1929 = vpack.c.bf16 %v1914, %v1913
    %v1930 = vpack.c.bf16 %v1916, %v1915
    %v1931 = vpack.c.bf16 %v1918, %v1917
    %v1932 = vpack.c.bf16 %v1920, %v1919
    %v1933 = vpack.c.bf16 %v1922, %v1921
    %v1934 = vpack.c.bf16 %v1924, %v1923
    %v1935 = vpack.c.bf16 %v1926, %v1925
    %v1936 = vpack.c.bf16 %v1928, %v1927
    %1937 = vst [vmem:[#allocation2 + $0x10] sm:$0xff] %v1929
    %1938 = vst [vmem:[#allocation2 + $0x28] sm:$0xff] %v1930
    %1939 = vst [vmem:[#allocation2 + $0x40] sm:$0xff] %v1931
    %1940 = vst [vmem:[#allocation2 + $0x58] sm:$0xff] %v1932
    %1941 = vst [vmem:[#allocation2 + $0x70] sm:$0xff] %v1933
    %1942 = vst [vmem:[#allocation2 + $0x88] sm:$0xff] %v1934
    %1943 = vst [vmem:[#allocation2 + $0xa0] sm:$0xff] %v1935
    %1944 = vst [vmem:[#allocation2 + $0xb8] sm:$0xff] %v1936
    %v1945 = vld [vmem:[%s8] sm:$0xf]
    %v1946 = vld [vmem:[#allocation2] sm:$0xff]
    %v1947 = vld [vmem:[#allocation2 + $0x8] sm:$0xff]
    %v1948 = vld [vmem:[#allocation2 + $0x10] sm:$0xff]
    %v1949 = vld [vmem:[#allocation2 + $0x18] sm:$0xff]
    %v1950 = vld [vmem:[#allocation2 + $0x20] sm:$0xff]
    %v1951 = vld [vmem:[#allocation2 + $0x28] sm:$0xff]
    %v1952 = vld [vmem:[#allocation2 + $0x30] sm:$0xff]
    %v1953 = vld [vmem:[#allocation2 + $0x38] sm:$0xff]
    %v1954 = vld [vmem:[#allocation2 + $0x40] sm:$0xff]
    %v1955 = vld [vmem:[#allocation2 + $0x48] sm:$0xff]
    %v1956 = vld [vmem:[#allocation2 + $0x50] sm:$0xff]
    %v1957 = vld [vmem:[#allocation2 + $0x58] sm:$0xff]
    %v1958 = vld [vmem:[#allocation2 + $0x60] sm:$0xff]
    %v1959 = vld [vmem:[#allocation2 + $0x68] sm:$0xff]
    %v1960 = vld [vmem:[#allocation2 + $0x70] sm:$0xff]
    %v1961 = vld [vmem:[#allocation2 + $0x78] sm:$0xff]
    %v1962 = vld [vmem:[#allocation2 + $0x80] sm:$0xff]
    %v1963 = vld [vmem:[#allocation2 + $0x88] sm:$0xff]
    %v1964 = vld [vmem:[#allocation2 + $0x90] sm:$0xff]
    %v1965 = vld [vmem:[#allocation2 + $0x98] sm:$0xff]
    %v1966 = vld [vmem:[#allocation2 + $0xa0] sm:$0xff]
    %v1967 = vld [vmem:[#allocation2 + $0xa8] sm:$0xff]
    %v1968 = vld [vmem:[#allocation2 + $0xb0] sm:$0xff]
    %v1969 = vld [vmem:[#allocation2 + $0xb8] sm:$0xff]
    %1970 = vmatprep.subr.bf16.mxu0 %v1947
    %1971 = vmatpush1.bf16.msra.mxu0 %v1946
    %1972 = vmatprep.subr.bf16.mxu0 %v1950
    %1973 = vmatpush1.bf16.msra.mxu0 %v1949
    %1974 = vmatprep.subr.bf16.mxu0 %v1953
    %1975 = vmatpush1.bf16.msra.mxu0 %v1952
    %1976 = vmatprep.subr.bf16.mxu0 %v1956
    %1977 = vmatpush1.bf16.msra.mxu0 %v1955
    %1978 = vmatprep.subr.bf16.mxu0 %v1959
    %1979 = vmatpush1.bf16.msra.mxu0 %v1958
    %1980 = vmatprep.subr.bf16.mxu0 %v1962
    %1981 = vmatpush1.bf16.msra.mxu0 %v1961
    %1982 = vmatprep.subr.bf16.mxu0 %v1965
    %1983 = vmatpush1.bf16.msra.mxu0 %v1964
    %1984 = vmatprep.subr.bf16.mxu0 %v1968
    %1985 = vmatpush1.bf16.msra.mxu0 %v1967
    %1986 = vmatprep.subr.bf16.mxu0 0
    %1987 = vmatpush1.bf16.msra.mxu0 0
    %1988 = vmatprep.subr.bf16.mxu0 0
    %1989 = vmatpush1.bf16.msra.mxu0 0
    %1990 = vmatprep.subr.bf16.mxu0 0
    %1991 = vmatpush1.bf16.msra.mxu0 0
    %1992 = vmatprep.subr.bf16.mxu0 0
    %1993 = vmatpush1.bf16.msra.mxu0 0
    %1994 = vmatprep.subr.bf16.mxu0 0
    %1995 = vmatpush1.bf16.msra.mxu0 0
    %1996 = vmatprep.subr.bf16.mxu0 0
    %1997 = vmatpush1.bf16.msra.mxu0 0
    %1998 = vmatprep.subr.bf16.mxu0 0
    %1999 = vmatpush1.bf16.msra.mxu0 0
    %2000 = vmatprep.subr.bf16.mxu0 0
    %2001 = vmatpush1.bf16.msra.mxu0 0
    %2002 = vmatprep.mubr.bf16.mxu0 0
    %2003 = vmatmul.mubr.bf16.gmra.mrb[0].mxu0 %v1945
    %v2004 = vpop.f32.mrb[0].mxu0
    %v2005 = vadd.f32 0.0, %v2004
    %v2006 = vpop.f32.mrb[0].mxu0
    %v2007 = vadd.f32 0.0, %v2006
    %v2008 = vpop.f32.mrb[0].mxu0
    %v2009 = vpop.f32.mrb[0].mxu0
    %2010 = vdwg.mxu0
    %2011 = vmatprep.subr.bf16.mxu0 0
    %2012 = vmatpush1.bf16.msra.mxu0 %v1948
    %2013 = vmatprep.subr.bf16.mxu0 0
    %2014 = vmatpush1.bf16.msra.mxu0 %v1951
    %2015 = vmatprep.subr.bf16.mxu0 0
    %2016 = vmatpush1.bf16.msra.mxu0 %v1954
    %2017 = vmatprep.subr.bf16.mxu0 0
    %2018 = vmatpush1.bf16.msra.mxu0 %v1957
    %2019 = vmatprep.subr.bf16.mxu0 0
    %2020 = vmatpush1.bf16.msra.mxu0 %v1960
    %2021 = vmatprep.subr.bf16.mxu0 0
    %2022 = vmatpush1.bf16.msra.mxu0 %v1963
    %2023 = vmatprep.subr.bf16.mxu0 0
    %2024 = vmatpush1.bf16.msra.mxu0 %v1966
    %2025 = vmatprep.subr.bf16.mxu0 0
    %2026 = vmatpush1.bf16.msra.mxu0 %v1969
    %2027 = vmatprep.subr.bf16.mxu0 0
    %2028 = vmatpush1.bf16.msra.mxu0 0
    %2029 = vmatprep.subr.bf16.mxu0 0
    %2030 = vmatpush1.bf16.msra.mxu0 0
    %2031 = vmatprep.subr.bf16.mxu0 0
    %2032 = vmatpush1.bf16.msra.mxu0 0
    %2033 = vmatprep.subr.bf16.mxu0 0
    %2034 = vmatpush1.bf16.msra.mxu0 0
    %2035 = vmatprep.subr.bf16.mxu0 0
    %2036 = vmatpush1.bf16.msra.mxu0 0
    %2037 = vmatprep.subr.bf16.mxu0 0
    %2038 = vmatpush1.bf16.msra.mxu0 0
    %2039 = vmatprep.subr.bf16.mxu0 0
    %2040 = vmatpush1.bf16.msra.mxu0 0
    %2041 = vmatprep.subr.bf16.mxu0 0
    %2042 = vmatpush1.bf16.msra.mxu0 0
    %2043 = vmatprep.mubr.bf16.mxu0 0
    %2044 = vmatmul.mubr.bf16.gmra.mrb[0].mxu0 %v1945
    %v2045 = vpop.f32.mrb[0].mxu0
    %v2046 = vadd.f32 0.0, %v2045
    %v2047 = vpop.f32.mrb[0].mxu0
    %v2048 = vpop.f32.mrb[0].mxu0
    %v2049 = vpop.f32.mrb[0].mxu0
    %2050 = vdwg.mxu0
    %v2051 = vpack.c.bf16 %v2005, %v2005
    %v2052 = vpack.c.bf16 %v2007, %v2007
    %v2053 = vpack.c.bf16 %v2046, %v2046
    %v2054 = vld [vmem:[#allocation11] sm:$0xf]
    %v2055 = vld [vmem:[#allocation11 + $0x4] sm:$0xf]
    %v2056 = vld [vmem:[#allocation11 + $0x8] sm:$0xf]
    %v2057 = vld [vmem:[#allocation11 + $0xc] sm:$0xf]
    %v2058 = vld [vmem:[#allocation11 + $0x10] sm:$0xf]
    %v2059 = vld [vmem:[#allocation11 + $0x14] sm:$0xf]
    %v2060 = vld [vmem:[#allocation11 + $0x18] sm:$0xf]
    %v2061 = vld [vmem:[#allocation11 + $0x1c] sm:$0xf]
    %v2062 = vld [vmem:[#allocation11 + $0x20] sm:$0xf]
    %v2063 = vld [vmem:[#allocation11 + $0x24] sm:$0xf]
    %v2064 = vld [vmem:[#allocation11 + $0x28] sm:$0xf]
    %v2065 = vld [vmem:[#allocation11 + $0x2c] sm:$0xf]
    %v2066 = vld [vmem:[#allocation11 + $0x30] sm:$0xf]
    %v2067 = vld [vmem:[#allocation11 + $0x34] sm:$0xf]
    %v2068 = vld [vmem:[#allocation11 + $0x38] sm:$0xf]
    %v2069 = vld [vmem:[#allocation11 + $0x3c] sm:$0xf]
    %v2070 = vld [vmem:[#allocation11 + $0x40] sm:$0xf]
    %v2071 = vld [vmem:[#allocation11 + $0x44] sm:$0xf]
    %v2072 = vld [vmem:[#allocation11 + $0x48] sm:$0xf]
    %v2073 = vld [vmem:[#allocation11 + $0x4c] sm:$0xf]
    %v2074 = vld [vmem:[#allocation11 + $0x50] sm:$0xf]
    %v2075 = vld [vmem:[#allocation11 + $0x54] sm:$0xf]
    %v2076 = vld [vmem:[#allocation11 + $0x58] sm:$0xf]
    %v2077 = vld [vmem:[#allocation11 + $0x5c] sm:$0xf]
    %v2078 = vld [vmem:[#allocation11 + $0x60] sm:$0xf]
    %v2079 = vld [vmem:[#allocation11 + $0x64] sm:$0xf]
    %v2080 = vld [vmem:[#allocation11 + $0x68] sm:$0xf]
    %v2081 = vld [vmem:[#allocation11 + $0x6c] sm:$0xf]
    %v2082 = vld [vmem:[#allocation11 + $0x70] sm:$0xf]
    %v2083 = vld [vmem:[#allocation11 + $0x74] sm:$0xf]
    %v2084 = vld [vmem:[#allocation11 + $0x78] sm:$0xf]
    %v2085 = vld [vmem:[#allocation11 + $0x7c] sm:$0xf]
    %v2086 = vld [vmem:[#allocation11 + $0x80] sm:$0xf]
    %v2087 = vld [vmem:[#allocation11 + $0x84] sm:$0xf]
    %v2088 = vld [vmem:[#allocation11 + $0x88] sm:$0xf]
    %v2089 = vld [vmem:[#allocation11 + $0x8c] sm:$0xf]
    %v2090 = vld [vmem:[#allocation11 + $0x90] sm:$0xf]
    %v2091 = vld [vmem:[#allocation11 + $0x94] sm:$0xf]
    %v2092 = vld [vmem:[#allocation11 + $0x98] sm:$0xf]
    %v2093 = vld [vmem:[#allocation11 + $0x9c] sm:$0xf]
    %v2094 = vld [vmem:[#allocation11 + $0xa0] sm:$0xf]
    %v2095 = vld [vmem:[#allocation11 + $0xa4] sm:$0xf]
    %v2096 = vld [vmem:[#allocation11 + $0xa8] sm:$0xf]
    %v2097 = vld [vmem:[#allocation11 + $0xac] sm:$0xf]
    %v2098 = vld [vmem:[#allocation11 + $0xb0] sm:$0xf]
    %v2099 = vld [vmem:[#allocation11 + $0xb4] sm:$0xf]
    %v2100 = vld [vmem:[#allocation11 + $0xb8] sm:$0xf]
    %v2101 = vld [vmem:[#allocation11 + $0xbc] sm:$0xf]
    %v2102 = vld [vmem:[%s10] sm:$0x1]
    %v2104 = vlaneseq
    %v2105 = vshrl.u32 %v2104, 7
    %v2106 = vsub.s32 0, %v2105
    %v2107 = vrot.slane %v2102, %v2106
    %v2157 = vunpack.c.l.b16 %v2054
    %v2158 = vunpack.c.l.b16 %v2055
    %v2159 = vunpack.c.l.b16 %v2056
    %v2160 = vunpack.c.l.b16 %v2057
    %v2161 = vunpack.c.l.b16 %v2058
    %v2162 = vunpack.c.l.b16 %v2059
    %v2163 = vunpack.c.l.b16 %v2060
    %v2164 = vunpack.c.l.b16 %v2061
    %v2165 = vunpack.c.l.b16 %v2062
    %v2166 = vunpack.c.l.b16 %v2063
    %v2167 = vunpack.c.l.b16 %v2064
    %v2168 = vunpack.c.l.b16 %v2065
    %v2169 = vunpack.c.l.b16 %v2066
    %v2170 = vunpack.c.l.b16 %v2067
    %v2171 = vunpack.c.l.b16 %v2068
    %v2172 = vunpack.c.l.b16 %v2069
    %v2173 = vunpack.c.l.b16 %v2070
    %v2174 = vunpack.c.l.b16 %v2071
    %v2175 = vunpack.c.l.b16 %v2072
    %v2176 = vunpack.c.l.b16 %v2073
    %v2177 = vunpack.c.l.b16 %v2074
    %v2178 = vunpack.c.l.b16 %v2075
    %v2179 = vunpack.c.l.b16 %v2076
    %v2180 = vunpack.c.l.b16 %v2077
    %v2181 = vunpack.c.l.b16 %v2078
    %v2182 = vunpack.c.l.b16 %v2079
    %v2183 = vunpack.c.l.b16 %v2080
    %v2184 = vunpack.c.l.b16 %v2081
    %v2185 = vunpack.c.l.b16 %v2082
    %v2186 = vunpack.c.l.b16 %v2083
    %v2187 = vunpack.c.l.b16 %v2084
    %v2188 = vunpack.c.l.b16 %v2085
    %v2189 = vunpack.c.l.b16 %v2086
    %v2190 = vunpack.c.l.b16 %v2087
    %v2191 = vunpack.c.l.b16 %v2088
    %v2192 = vunpack.c.l.b16 %v2089
    %v2193 = vunpack.c.l.b16 %v2090
    %v2194 = vunpack.c.l.b16 %v2091
    %v2195 = vunpack.c.l.b16 %v2092
    %v2196 = vunpack.c.l.b16 %v2093
    %v2197 = vunpack.c.l.b16 %v2094
    %v2198 = vunpack.c.l.b16 %v2095
    %v2199 = vunpack.c.l.b16 %v2096
    %v2200 = vunpack.c.l.b16 %v2097
    %v2201 = vunpack.c.l.b16 %v2098
    %v2202 = vunpack.c.l.b16 %v2099
    %v2203 = vunpack.c.l.b16 %v2100
    %v2204 = vunpack.c.l.b16 %v2101
    %v2205 = vpack.c.b16 %v2158, %v2157
    %v2206 = vpack.c.b16 %v2160, %v2159
    %v2207 = vpack.c.b16 %v2162, %v2161
    %v2208 = vpack.c.b16 %v2164, %v2163
    %v2209 = vpack.c.b16 %v2166, %v2165
    %v2210 = vpack.c.b16 %v2168, %v2167
    %v2211 = vpack.c.b16 %v2170, %v2169
    %v2212 = vpack.c.b16 %v2172, %v2171
    %v2213 = vpack.c.b16 %v2174, %v2173
    %v2214 = vpack.c.b16 %v2176, %v2175
    %v2215 = vpack.c.b16 %v2178, %v2177
    %v2216 = vpack.c.b16 %v2180, %v2179
    %v2217 = vpack.c.b16 %v2182, %v2181
    %v2218 = vpack.c.b16 %v2184, %v2183
    %v2219 = vpack.c.b16 %v2186, %v2185
    %v2220 = vpack.c.b16 %v2188, %v2187
    %v2221 = vpack.c.b16 %v2190, %v2189
    %v2222 = vpack.c.b16 %v2192, %v2191
    %v2223 = vpack.c.b16 %v2194, %v2193
    %v2224 = vpack.c.b16 %v2196, %v2195
    %v2225 = vpack.c.b16 %v2198, %v2197
    %v2226 = vpack.c.b16 %v2200, %v2199
    %v2227 = vpack.c.b16 %v2202, %v2201
    %v2228 = vpack.c.b16 %v2204, %v2203
    %2253 = vmatprep.subr.bf16.mxu0 0
    %2254 = vmatpush1.bf16.msra.mxu0 %v2205
    %2255 = vmatprep.subr.bf16.mxu0 0
    %2256 = vmatpush1.bf16.msra.mxu0 %v2206
    %2257 = vmatprep.subr.bf16.mxu0 0
    %2258 = vmatpush1.bf16.msra.mxu0 %v2207
    %2259 = vmatprep.subr.bf16.mxu0 0
    %2260 = vmatpush1.bf16.msra.mxu0 %v2208
    %2261 = vmatprep.subr.bf16.mxu0 0
    %2262 = vmatpush1.bf16.msra.mxu0 %v2209
    %2263 = vmatprep.subr.bf16.mxu0 0
    %2264 = vmatpush1.bf16.msra.mxu0 %v2210
    %2265 = vmatprep.subr.bf16.mxu0 0
    %2266 = vmatpush1.bf16.msra.mxu0 %v2211
    %2267 = vmatprep.subr.bf16.mxu0 0
    %2268 = vmatpush1.bf16.msra.mxu0 %v2212
    %2269 = vmatprep.subr.bf16.mxu0 0
    %2270 = vmatpush1.bf16.msra.mxu0 %v2213
    %2271 = vmatprep.subr.bf16.mxu0 0
    %2272 = vmatpush1.bf16.msra.mxu0 %v2214
    %2273 = vmatprep.subr.bf16.mxu0 0
    %2274 = vmatpush1.bf16.msra.mxu0 %v2215
    %2275 = vmatprep.subr.bf16.mxu0 0
    %2276 = vmatpush1.bf16.msra.mxu0 %v2216
    %2277 = vmatprep.subr.bf16.mxu0 0
    %2278 = vmatpush1.bf16.msra.mxu0 %v2217
    %2279 = vmatprep.subr.bf16.mxu0 0
    %2280 = vmatpush1.bf16.msra.mxu0 %v2218
    %2281 = vmatprep.subr.bf16.mxu0 0
    %2282 = vmatpush1.bf16.msra.mxu0 %v2219
    %2283 = vmatprep.subr.bf16.mxu0 0
    %2284 = vmatpush1.bf16.msra.mxu0 %v2220
    %2285 = vmatprep.mubr.bf16.mxu0 %v2052
    %2286 = vmatmul.mubr.bf16.gmra.mrb[0].mxu0 %v2051
    %v2287 = vpop.f32.mrb[0].mxu0
    %v2288 = vadd.f32 %v2107, %v2287
    %v2289 = vpop.f32.mrb[0].mxu0
    %v2290 = vpop.f32.mrb[0].mxu0
    %v2291 = vpop.f32.mrb[0].mxu0
    %2292 = vdwg.mxu0
    %2293 = vmatprep.subr.bf16.mxu0 0
    %2294 = vmatpush1.bf16.msra.mxu0 %v2221
    %2295 = vmatprep.subr.bf16.mxu0 0
    %2296 = vmatpush1.bf16.msra.mxu0 %v2222
    %2297 = vmatprep.subr.bf16.mxu0 0
    %2298 = vmatpush1.bf16.msra.mxu0 %v2223
    %2299 = vmatprep.subr.bf16.mxu0 0
    %2300 = vmatpush1.bf16.msra.mxu0 %v2224
    %2301 = vmatprep.subr.bf16.mxu0 0
    %2302 = vmatpush1.bf16.msra.mxu0 %v2225
    %2303 = vmatprep.subr.bf16.mxu0 0
    %2304 = vmatpush1.bf16.msra.mxu0 %v2226
    %2305 = vmatprep.subr.bf16.mxu0 0
    %2306 = vmatpush1.bf16.msra.mxu0 %v2227
    %2307 = vmatprep.subr.bf16.mxu0 0
    %2308 = vmatpush1.bf16.msra.mxu0 %v2228
    %2309 = vmatprep.subr.bf16.mxu0 0
    %2310 = vmatpush1.bf16.msra.mxu0 0
    %2311 = vmatprep.subr.bf16.mxu0 0
    %2312 = vmatpush1.bf16.msra.mxu0 0
    %2313 = vmatprep.subr.bf16.mxu0 0
    %2314 = vmatpush1.bf16.msra.mxu0 0
    %2315 = vmatprep.subr.bf16.mxu0 0
    %2316 = vmatpush1.bf16.msra.mxu0 0
    %2317 = vmatprep.subr.bf16.mxu0 0
    %2318 = vmatpush1.bf16.msra.mxu0 0
    %2319 = vmatprep.subr.bf16.mxu0 0
    %2320 = vmatpush1.bf16.msra.mxu0 0
    %2321 = vmatprep.subr.bf16.mxu0 0
    %2322 = vmatpush1.bf16.msra.mxu0 0
    %2323 = vmatprep.subr.bf16.mxu0 0
    %2324 = vmatpush1.bf16.msra.mxu0 0
    %2325 = vmatprep.mubr.bf16.mxu0 0
    %2326 = vmatmul.mubr.bf16.gmra.mrb[0].mxu0 %v2053
    %v2327 = vpop.f32.mrb[0].mxu0
    %v2328 = vadd.f32 %v2288, %v2327
    %v2329 = vpop.f32.mrb[0].mxu0
    %v2330 = vpop.f32.mrb[0].mxu0
    %v2331 = vpop.f32.mrb[0].mxu0
    %2332 = vdwg.mxu0
    %v2333 = vmax.f32 %v2328, 0.0
    %v2334 = vpack.c.bf16 %v2333, %v2333
    %v2335 = vld [vmem:[#allocation12] sm:$0xf]
    %v2336 = vld [vmem:[#allocation12 + $0x4] sm:$0xf]
    %v2337 = vld [vmem:[#allocation12 + $0x8] sm:$0xf]
    %v2338 = vld [vmem:[#allocation12 + $0xc] sm:$0xf]
    %v2339 = vld [vmem:[#allocation12 + $0x10] sm:$0xf]
    %v2340 = vld [vmem:[#allocation12 + $0x14] sm:$0xf]
    %v2341 = vld [vmem:[#allocation12 + $0x18] sm:$0xf]
    %v2342 = vld [vmem:[#allocation12 + $0x1c] sm:$0xf]
    %v2343 = vld [vmem:[#allocation12 + $0x20] sm:$0xf]
    %v2344 = vld [vmem:[#allocation12 + $0x24] sm:$0xf]
    %v2345 = vld [vmem:[#allocation12 + $0x28] sm:$0xf]
    %v2346 = vld [vmem:[#allocation12 + $0x2c] sm:$0xf]
    %v2347 = vld [vmem:[#allocation12 + $0x30] sm:$0xf]
    %v2348 = vld [vmem:[#allocation12 + $0x34] sm:$0xf]
    %v2349 = vld [vmem:[#allocation12 + $0x38] sm:$0xf]
    %v2350 = vld [vmem:[#allocation12 + $0x3c] sm:$0xf]
    %v2351 = vld [vmem:[%s12] sm:$0x1]
    %v2353 = vlaneseq
    %v2354 = vshrl.u32 %v2353, 7
    %v2355 = vsub.s32 0, %v2354
    %v2356 = vrot.slane %v2351, %v2355
    %v2374 = vunpack.c.l.b16 %v2335
    %v2375 = vunpack.c.l.b16 %v2336
    %v2376 = vunpack.c.l.b16 %v2337
    %v2377 = vunpack.c.l.b16 %v2338
    %v2378 = vunpack.c.l.b16 %v2339
    %v2379 = vunpack.c.l.b16 %v2340
    %v2380 = vunpack.c.l.b16 %v2341
    %v2381 = vunpack.c.l.b16 %v2342
    %v2382 = vunpack.c.l.b16 %v2343
    %v2383 = vunpack.c.l.b16 %v2344
    %v2384 = vunpack.c.l.b16 %v2345
    %v2385 = vunpack.c.l.b16 %v2346
    %v2386 = vunpack.c.l.b16 %v2347
    %v2387 = vunpack.c.l.b16 %v2348
    %v2388 = vunpack.c.l.b16 %v2349
    %v2389 = vunpack.c.l.b16 %v2350
    %v2390 = vpack.c.b16 %v2375, %v2374
    %v2391 = vpack.c.b16 %v2377, %v2376
    %v2392 = vpack.c.b16 %v2379, %v2378
    %v2393 = vpack.c.b16 %v2381, %v2380
    %v2394 = vpack.c.b16 %v2383, %v2382
    %v2395 = vpack.c.b16 %v2385, %v2384
    %v2396 = vpack.c.b16 %v2387, %v2386
    %v2397 = vpack.c.b16 %v2389, %v2388
    %2406 = vmatprep.subr.bf16.mxu0 0
    %2407 = vmatpush1.bf16.msra.mxu0 %v2390
    %2408 = vmatprep.subr.bf16.mxu0 0
    %2409 = vmatpush1.bf16.msra.mxu0 %v2391
    %2410 = vmatprep.subr.bf16.mxu0 0
    %2411 = vmatpush1.bf16.msra.mxu0 %v2392
    %2412 = vmatprep.subr.bf16.mxu0 0
    %2413 = vmatpush1.bf16.msra.mxu0 %v2393
    %2414 = vmatprep.subr.bf16.mxu0 0
    %2415 = vmatpush1.bf16.msra.mxu0 %v2394
    %2416 = vmatprep.subr.bf16.mxu0 0
    %2417 = vmatpush1.bf16.msra.mxu0 %v2395
    %2418 = vmatprep.subr.bf16.mxu0 0
    %2419 = vmatpush1.bf16.msra.mxu0 %v2396
    %2420 = vmatprep.subr.bf16.mxu0 0
    %2421 = vmatpush1.bf16.msra.mxu0 %v2397
    %2422 = vmatprep.subr.bf16.mxu0 0
    %2423 = vmatpush1.bf16.msra.mxu0 0
    %2424 = vmatprep.subr.bf16.mxu0 0
    %2425 = vmatpush1.bf16.msra.mxu0 0
    %2426 = vmatprep.subr.bf16.mxu0 0
    %2427 = vmatpush1.bf16.msra.mxu0 0
    %2428 = vmatprep.subr.bf16.mxu0 0
    %2429 = vmatpush1.bf16.msra.mxu0 0
    %2430 = vmatprep.subr.bf16.mxu0 0
    %2431 = vmatpush1.bf16.msra.mxu0 0
    %2432 = vmatprep.subr.bf16.mxu0 0
    %2433 = vmatpush1.bf16.msra.mxu0 0
    %2434 = vmatprep.subr.bf16.mxu0 0
    %2435 = vmatpush1.bf16.msra.mxu0 0
    %2436 = vmatprep.subr.bf16.mxu0 0
    %2437 = vmatpush1.bf16.msra.mxu0 0
    %2438 = vmatprep.mubr.bf16.mxu0 0
    %2439 = vmatmul.mubr.bf16.gmra.mrb[0].mxu0 %v2334
    %v2440 = vpop.f32.mrb[0].mxu0
    %v2441 = vadd.f32 %v2356, %v2440
    %v2442 = vpop.f32.mrb[0].mxu0
    %v2443 = vpop.f32.mrb[0].mxu0
    %v2444 = vpop.f32.mrb[0].mxu0
    %2445 = vdwg.mxu0
    %2446 = vst [vmem:[#allocation14] sm:$0xff] %v2441
    // Predicated region
    $region78: #{tpu_custom_call.1} parent=1 // pred_check
      _
    $region79: #{tpu_custom_call.1} parent=1 // pred_check_branch
      %2448 = sbr.rel (0) target = $region81
    $region80: #{tpu_custom_call.1} parent=1 // pred_region
      %s2450 = ssub.s32 128, 128
      %2451 = vsyncadd [#allocation5], %s2450
      %s2453 = sshll.u32 [#allocation14], 4
      %s2454 = int_to_ptr.vmem [resolvable:$true] %s2453
      %2456 = dma.vmem_to_hbm [thread:$0]  %s2454, 128, %s13, [#allocation5]
    $region81: #{tpu_custom_call.1} parent=1 // pred_fallthru
      _
    // Predicated region
    $region82: #{tpu_custom_call.1} parent=1 // pred_check
      _
    $region83: #{tpu_custom_call.1} parent=1 // pred_check_branch
      %2458 = sbr.rel (0) target = $region85
    $region84: #{tpu_custom_call.1} parent=1 // pred_region
      %2459 = dma.done [#allocation5], 128
    $region85: #{tpu_custom_call.1} parent=1 // pred_fallthru
      _
    %2460 = vsyncpa [#allocation4], 1
    %2461 = vsyncpa [#allocation7], 1
    %2462 = vsyncpa [#allocation10], 1
    %2463 = vsyncpa [#allocation13], 1
    %2464 = vsyncpa [#allocation5], 1

</llo_original>
